<compile_context>
chip_gen: v7x
topology: tpu7x:2x2x1
jax: 0.10.0
libtpu: 0.0.40
codegen_flags: <defaults>
</compile_context>

<pallas_src>
import math
import functools

import jax
import jax.numpy as jnp
from jax import lax
from jax.experimental import pallas as pl
from jax.experimental.pallas import tpu as pltpu


def _tpu_generation() -> int:
    """Best-effort TPU generation sniff from device_kind (4/5/6/7, 0 = unknown)."""
    try:
        kind = jax.devices()[0].device_kind.lower()
    except Exception:
        return 0
    for gen in (4, 5, 6):
        if f"v{gen}" in kind:
            return gen
    if "7" in kind:          # "tpu7x", "tpu v7", ...
        return 7
    return 0


def _attn_kernel(x_ref, wqkv_ref, bqkv_ref, wproj_ref, bproj_ref, o_ref,
                 qkvh_ref, yh_ref, y_ref, *, n_head, head_dim, exp_dtype):
    """Grid = (B,).  One batch element per step:
       fused QKV matmul -> per-head masked softmax attention (fori_loop over heads,
       head-major VMEM scratch) -> single fused output projection."""
    T = x_ref.shape[1]

    x = x_ref[0]                                                        # (T, C) bf16

    # Fused QKV projection (1/sqrt(head_dim) folded into the q columns in the wrapper).
    # f32 MXU accumulation + f32 bias add, then ONE bf16 cast of the whole (T, 3C) tensor.
    qkv = jnp.dot(x, wqkv_ref[...], preferred_element_type=jnp.float32)
    qkv = (qkv + bqkv_ref[...]).astype(jnp.bfloat16)                    # (T, 3C) bf16

    # Scatter to a head-major scratch (3*n_head, T, hd) with STATIC lane slices so the
    # head loop below can index heads on the leading dim (cheap/safe dynamic indexing;
    # avoids dynamic lane-dim slices of the packed (T, 3C) tensor).
    for j in range(3 * n_head):
        qkvh_ref[j] = qkv[:, j * head_dim:(j + 1) * head_dim]

    # The module's mask, generated in-kernel (no HBM/VMEM mask array):
    # large-negative STRICTLY BELOW the diagonal (tokens attend to current + future).
    row = lax.broadcasted_iota(jnp.int32, (T, T), 0)
    col = lax.broadcasted_iota(jnp.int32, (T, T), 1)
    mask_bias = jnp.where(col < row, jnp.float32(-1e30), jnp.float32(0.0))

    def head_body(h, carry):
        q = qkvh_ref[h]                                                 # (T, hd) bf16
        k = qkvh_ref[n_head + h]
        v = qkvh_ref[2 * n_head + h]

        # q @ k.T on the MXU (contraction over head_dim), f32 accumulation.
        att = lax.dot_general(q, k, (((1,), (1,)), ((), ())),
                              preferred_element_type=jnp.float32)       # (T, T) f32
        att = att + mask_bias
        m = jnp.max(att, axis=-1, keepdims=True)
        # Mask add + max-subtract in f32; exp in bf16 on v6e/v7x, f32 on v5e/unknown.
        p = jnp.exp((att - m).astype(exp_dtype))
        denom = jnp.sum(p, axis=-1, keepdims=True, dtype=jnp.float32)   # (T, 1) f32

        yh = jnp.dot(p.astype(jnp.bfloat16), v,
                     preferred_element_type=jnp.float32)                # (T, hd) f32
        # Deferred softmax normalization: (T, hd) multiply via EUP approx reciprocal.
        yh = yh * pl.reciprocal(denom, approx=True)
        yh_ref[h] = yh.astype(jnp.bfloat16)
        return carry

    # fori_loop (not a static unroll) bounds the live set to ONE head's (T, T) tiles.
    lax.fori_loop(0, n_head, head_body, 0)

    # Repack heads into a (T, C) bf16 activation (static slices, no concatenate),
    # then ONE fused (T, C) @ (C, C) output projection.
    for h in range(n_head):
        y_ref[:, h * head_dim:(h + 1) * head_dim] = yh_ref[h]

    out = jnp.dot(y_ref[...], wproj_ref[...], preferred_element_type=jnp.float32)
    out = out + bproj_ref[...]
    o_ref[0] = out.astype(o_ref.dtype)


def _resident_spec(shape, single_buffered):
    """Grid-invariant (weight/bias) BlockSpec; single-buffered when supported."""
    index_map = lambda b: (0,) * len(shape)
    if single_buffered and hasattr(pl, "Buffered"):
        try:
            return pl.BlockSpec(shape, index_map, pipeline_mode=pl.Buffered(1))
        except TypeError:
            pass
    return pl.BlockSpec(shape, index_map)


def _build_attention_call(*, B, T, C, n_head, hd, out_dtype, exp_dtype,
                          vmem_limit_bytes, single_buffered_weights):
    kernel = functools.partial(_attn_kernel, n_head=n_head, head_dim=hd,
                               exp_dtype=exp_dtype)
    return pl.pallas_call(
        kernel,
        out_shape=jax.ShapeDtypeStruct((B, T, C), out_dtype),
        grid_spec=pltpu.PrefetchScalarGridSpec(
            num_scalar_prefetch=0,
            grid=(B,),
            in_specs=[
                pl.BlockSpec((1, T, C), lambda b: (b, 0, 0)),               # x      bf16
                _resident_spec((C, 3 * C), single_buffered_weights),        # w_qkv  bf16
                _resident_spec((1, 3 * C), single_buffered_weights),        # b_qkv  f32
                _resident_spec((C, C), single_buffered_weights),            # w_proj bf16
                _resident_spec((1, C), single_buffered_weights),            # b_proj f32
            ],
            out_specs=pl.BlockSpec((1, T, C), lambda b: (b, 0, 0)),
            scratch_shapes=[
                pltpu.VMEM((3 * n_head, T, hd), jnp.bfloat16),   # head-major q|k|v
                pltpu.VMEM((n_head, T, hd), jnp.bfloat16),       # per-head attention out
                pltpu.VMEM((T, C), jnp.bfloat16),                # packed y for c_proj
            ],
        ),
        compiler_params=pltpu.CompilerParams(
            dimension_semantics=("parallel",),
            vmem_limit_bytes=vmem_limit_bytes),
    )


def causal_self_attention(x, w_attn, b_attn, w_proj, b_proj, n_head):
    """x: (B,T,C) f32.  w_attn: (3C,C), b_attn: (3C,), w_proj: (C,C), b_proj: (C,).
    PyTorch Linear computes x @ W.T + b.  abs_emb=True, no flash, dropout p = 0."""
    B, T, C = x.shape
    assert C % n_head == 0
    hd = C // n_head

    # Repack c_attn columns: f = h*3*hd + which*hd + d  ->  which*C + h*hd + d,
    # i.e. layout [q(all heads) | k(all heads) | v(all heads)].
    wt = jnp.transpose(w_attn).reshape(C, n_head, 3, hd)        # (C, nh, 3, hd)
    bt = b_attn.reshape(n_head, 3, hd)
    # Fold the 1/sqrt(head_dim) attention scale into the q projection (weight + bias).
    scale = jnp.array([1.0 / math.sqrt(hd), 1.0, 1.0], jnp.float32)
    wt = wt * scale.reshape(1, 1, 3, 1)
    bt = bt * scale.reshape(1, 3, 1)
    w_qkv = jnp.transpose(wt, (0, 2, 1, 3)).reshape(C, 3 * C).astype(jnp.bfloat16)
    b_qkv = jnp.transpose(bt, (1, 0, 2)).reshape(1, 3 * C).astype(jnp.float32)

    w_out = jnp.transpose(w_proj).astype(jnp.bfloat16)          # (C, C)
    b_out = b_proj.reshape(1, C).astype(jnp.float32)

    # bf16 activations on the wire: halves x's HBM->VMEM DMA and removes the in-kernel
    # cast pass.  Output stays in x.dtype (f32) for faithfulness to the torch module.
    x_bf16 = x.astype(jnp.bfloat16)

    gen = _tpu_generation()
    exp_dtype = jnp.bfloat16 if gen in (6, 7) else jnp.float32   # no bf16 EUP on v5e
    if gen == 7:
        vmem_limit = 48 * 1024 * 1024        # 64 MiB physical per TC -> leave headroom
    elif gen in (4, 5, 6):
        vmem_limit = 96 * 1024 * 1024        # 128 MiB physical
    else:
        vmem_limit = None                    # unknown chip: keep compiler default

    args = (x_bf16, w_qkv, b_qkv, w_out, b_out)
    attempts = (
        dict(exp_dtype=exp_dtype, single_buffered_weights=True),
        # Version-safe fallback if pl.Buffered(1) or bf16 exp is rejected by this
        # JAX / Mosaic build.
        dict(exp_dtype=jnp.float32, single_buffered_weights=False),
    )
    last_err = None
    for opts in attempts:
        try:
            call = _build_attention_call(B=B, T=T, C=C, n_head=n_head, hd=hd,
                                         out_dtype=x.dtype,
                                         vmem_limit_bytes=vmem_limit, **opts)
            return call(*args)
        except Exception as e:               # pragma: no cover
            last_err = e
    raise last_err


def _reference(x, w_attn, b_attn, w_proj, b_proj, n_head):
    """Pure-JAX f32 mirror of the PyTorch forward (same config branches)."""
    B, T, C = x.shape
    hd = C // n_head
    qkv = x @ w_attn.T + b_attn                                    # (B, T, 3C)
    qkv = qkv.reshape(B, T, n_head, 3 * hd).transpose(0, 2, 1, 3)  # (B, nh, T, 3hd)
    q, k, v = jnp.split(qkv, 3, axis=-1)
    att = jnp.einsum('bhqd,bhkd->bhqk', q, k) / math.sqrt(hd)
    row = lax.broadcasted_iota(jnp.int32, (T, T), 0)
    col = lax.broadcasted_iota(jnp.int32, (T, T), 1)
    att = att + jnp.where(col < row, -jnp.inf, 0.0)
    att = jax.nn.softmax(att, axis=-1)
    y = jnp.einsum('bhqk,bhkd->bhqd', att, v)
    y = y.transpose(0, 2, 1, 3).reshape(B, T, C)
    return y @ w_proj.T + b_proj


if __name__ == "__main__":
    B, T, C, n_head = 2, 8, 32, 4            # block_size >= T; head_dim = 8

    key = jax.random.PRNGKey(0)
    kx, kw1, kb1, kw2, kb2 = jax.random.split(key, 5)
    x = jax.random.normal(kx, (B, T, C), dtype=jnp.float32)
    w_attn = 0.02 * jax.random.normal(kw1, (3 * C, C), dtype=jnp.float32)
    b_attn = 0.02 * jax.random.normal(kb1, (3 * C,), dtype=jnp.float32)
    w_proj = 0.02 * jax.random.normal(kw2, (C, C), dtype=jnp.float32)
    b_proj = 0.02 * jax.random.normal(kb2, (C,), dtype=jnp.float32)

    out = causal_self_attention(x, w_attn, b_attn, w_proj, b_proj, n_head)
    out = jax.block_until_ready(out)

    ref = _reference(x, w_attn, b_attn, w_proj, b_proj, n_head)
    assert out.shape == (B, T, C)
    # Tolerance accounts for bf16 MXU operands / bf16 exp (f32 accumulation) + approx
    # reciprocal in the deferred softmax normalization.
    assert jnp.allclose(out, ref, rtol=2e-2, atol=2e-2), "mismatch vs JAX reference"

    print("KERNEL_OK")
</pallas_src>

<mosaic_0001>
module attributes {stable_mosaic.version = 11 : i64} {
  func.func @_attn_kernel(%arg0: i32, %arg1: memref<1x8x32xbf16, #tpu.memory_space<vmem>>, %arg2: memref<32x96xbf16, #tpu.memory_space<vmem>>, %arg3: memref<1x96xf32, #tpu.memory_space<vmem>>, %arg4: memref<32x32xbf16, #tpu.memory_space<vmem>>, %arg5: memref<1x32xf32, #tpu.memory_space<vmem>>, %arg6: memref<1x8x32xf32, #tpu.memory_space<vmem>>, %arg7: memref<12x8x8xbf16, #tpu.memory_space<vmem>>, %arg8: memref<4x8x8xbf16, #tpu.memory_space<vmem>>, %arg9: memref<8x32xbf16, #tpu.memory_space<vmem>>) attributes {dimension_semantics = [#tpu.dimension_semantics<parallel>], iteration_bounds = array<i64: 2>, scalar_prefetch = 0 : i64, scratch_operands = 3 : i64, tpu.core_type = #tpu.core_type<tc>, window_params = [{transform_indices = @transform_0, window_bounds = array<i64: 1, 8, 32>}, {pipeline_mode = #tpu.pipeline_mode<synchronous>, transform_indices = @transform_1, window_bounds = array<i64: 32, 96>}, {pipeline_mode = #tpu.pipeline_mode<synchronous>, transform_indices = @transform_2, window_bounds = array<i64: 1, 96>}, {pipeline_mode = #tpu.pipeline_mode<synchronous>, transform_indices = @transform_3, window_bounds = array<i64: 32, 32>}, {pipeline_mode = #tpu.pipeline_mode<synchronous>, transform_indices = @transform_4, window_bounds = array<i64: 1, 32>}, {transform_indices = @transform_5, window_bounds = array<i64: 1, 8, 32>}]} {
    %c0 = arith.constant 0 : index
    %c0_0 = arith.constant 0 : index
    %c0_1 = arith.constant 0 : index
    %0 = vector.load %arg1[%c0, %c0_0, %c0_1] : memref<1x8x32xbf16, #tpu.memory_space<vmem>>, vector<1x8x32xbf16>
    %1 = vector.shape_cast %0 : vector<1x8x32xbf16> to vector<8x32xbf16>
    %c0_2 = arith.constant 0 : index
    %c0_3 = arith.constant 0 : index
    %2 = vector.load %arg2[%c0_2, %c0_3] : memref<32x96xbf16, #tpu.memory_space<vmem>>, vector<32x96xbf16>
    %cst = arith.constant dense<0.000000e+00> : vector<8x96xf32>
    %3 = tpu.matmul %1, %2, %cst {dimension_numbers = #tpu.dot_dimension_numbers<[1], [0], [0], [1], [0, 0, 1, 1], [], []>} : vector<8x32xbf16>, vector<32x96xbf16>, vector<8x96xf32> -> vector<8x96xf32>
    %c0_4 = arith.constant 0 : index
    %c0_5 = arith.constant 0 : index
    %4 = vector.load %arg3[%c0_4, %c0_5] : memref<1x96xf32, #tpu.memory_space<vmem>>, vector<1x96xf32>
    %5 = vector.broadcast %4 : vector<1x96xf32> to vector<8x96xf32>
    %6 = arith.addf %3, %5 : vector<8x96xf32>
    %7 = arith.truncf %6 : vector<8x96xf32> to vector<8x96xbf16>
    %8 = vector.extract_strided_slice %7 {offsets = [0, 0], sizes = [8, 8], strides = [1, 1]} : vector<8x96xbf16> to vector<8x8xbf16>
    %c0_6 = arith.constant 0 : index
    %c0_7 = arith.constant 0 : index
    %c0_8 = arith.constant 0 : index
    %9 = vector.load %arg7[%c0_6, %c0_7, %c0_8] : memref<12x8x8xbf16, #tpu.memory_space<vmem>>, vector<1x8x8xbf16>
    %10 = vector.shape_cast %9 : vector<1x8x8xbf16> to vector<8x8xbf16>
    %11 = vector.shape_cast %8 : vector<8x8xbf16> to vector<1x8x8xbf16>
    tpu.vector_store %arg7[%c0_6, %c0_7, %c0_8], %11 {strides = array<i32>} : memref<12x8x8xbf16, #tpu.memory_space<vmem>>, vector<1x8x8xbf16>,
    %12 = vector.extract_strided_slice %7 {offsets = [0, 8], sizes = [8, 8], strides = [1, 1]} : vector<8x96xbf16> to vector<8x8xbf16>
    %c1 = arith.constant 1 : index
    %c0_9 = arith.constant 0 : index
    %c0_10 = arith.constant 0 : index
    %13 = vector.load %arg7[%c1, %c0_9, %c0_10] : memref<12x8x8xbf16, #tpu.memory_space<vmem>>, vector<1x8x8xbf16>
    %14 = vector.shape_cast %13 : vector<1x8x8xbf16> to vector<8x8xbf16>
    %15 = vector.shape_cast %12 : vector<8x8xbf16> to vector<1x8x8xbf16>
    tpu.vector_store %arg7[%c1, %c0_9, %c0_10], %15 {strides = array<i32>} : memref<12x8x8xbf16, #tpu.memory_space<vmem>>, vector<1x8x8xbf16>,
    %16 = vector.extract_strided_slice %7 {offsets = [0, 16], sizes = [8, 8], strides = [1, 1]} : vector<8x96xbf16> to vector<8x8xbf16>
    %c2 = arith.constant 2 : index
    %c0_11 = arith.constant 0 : index
    %c0_12 = arith.constant 0 : index
    %17 = vector.load %arg7[%c2, %c0_11, %c0_12] : memref<12x8x8xbf16, #tpu.memory_space<vmem>>, vector<1x8x8xbf16>
    %18 = vector.shape_cast %17 : vector<1x8x8xbf16> to vector<8x8xbf16>
    %19 = vector.shape_cast %16 : vector<8x8xbf16> to vector<1x8x8xbf16>
    tpu.vector_store %arg7[%c2, %c0_11, %c0_12], %19 {strides = array<i32>} : memref<12x8x8xbf16, #tpu.memory_space<vmem>>, vector<1x8x8xbf16>,
    %20 = vector.extract_strided_slice %7 {offsets = [0, 24], sizes = [8, 8], strides = [1, 1]} : vector<8x96xbf16> to vector<8x8xbf16>
    %c3 = arith.constant 3 : index
    %c0_13 = arith.constant 0 : index
    %c0_14 = arith.constant 0 : index
    %21 = vector.load %arg7[%c3, %c0_13, %c0_14] : memref<12x8x8xbf16, #tpu.memory_space<vmem>>, vector<1x8x8xbf16>
    %22 = vector.shape_cast %21 : vector<1x8x8xbf16> to vector<8x8xbf16>
    %23 = vector.shape_cast %20 : vector<8x8xbf16> to vector<1x8x8xbf16>
    tpu.vector_store %arg7[%c3, %c0_13, %c0_14], %23 {strides = array<i32>} : memref<12x8x8xbf16, #tpu.memory_space<vmem>>, vector<1x8x8xbf16>,
    %24 = vector.extract_strided_slice %7 {offsets = [0, 32], sizes = [8, 8], strides = [1, 1]} : vector<8x96xbf16> to vector<8x8xbf16>
    %c4 = arith.constant 4 : index
    %c0_15 = arith.constant 0 : index
    %c0_16 = arith.constant 0 : index
    %25 = vector.load %arg7[%c4, %c0_15, %c0_16] : memref<12x8x8xbf16, #tpu.memory_space<vmem>>, vector<1x8x8xbf16>
    %26 = vector.shape_cast %25 : vector<1x8x8xbf16> to vector<8x8xbf16>
    %27 = vector.shape_cast %24 : vector<8x8xbf16> to vector<1x8x8xbf16>
    tpu.vector_store %arg7[%c4, %c0_15, %c0_16], %27 {strides = array<i32>} : memref<12x8x8xbf16, #tpu.memory_space<vmem>>, vector<1x8x8xbf16>,
    %28 = vector.extract_strided_slice %7 {offsets = [0, 40], sizes = [8, 8], strides = [1, 1]} : vector<8x96xbf16> to vector<8x8xbf16>
    %c5 = arith.constant 5 : index
    %c0_17 = arith.constant 0 : index
    %c0_18 = arith.constant 0 : index
    %29 = vector.load %arg7[%c5, %c0_17, %c0_18] : memref<12x8x8xbf16, #tpu.memory_space<vmem>>, vector<1x8x8xbf16>
    %30 = vector.shape_cast %29 : vector<1x8x8xbf16> to vector<8x8xbf16>
    %31 = vector.shape_cast %28 : vector<8x8xbf16> to vector<1x8x8xbf16>
    tpu.vector_store %arg7[%c5, %c0_17, %c0_18], %31 {strides = array<i32>} : memref<12x8x8xbf16, #tpu.memory_space<vmem>>, vector<1x8x8xbf16>,
    %32 = vector.extract_strided_slice %7 {offsets = [0, 48], sizes = [8, 8], strides = [1, 1]} : vector<8x96xbf16> to vector<8x8xbf16>
    %c6 = arith.constant 6 : index
    %c0_19 = arith.constant 0 : index
    %c0_20 = arith.constant 0 : index
    %33 = vector.load %arg7[%c6, %c0_19, %c0_20] : memref<12x8x8xbf16, #tpu.memory_space<vmem>>, vector<1x8x8xbf16>
    %34 = vector.shape_cast %33 : vector<1x8x8xbf16> to vector<8x8xbf16>
    %35 = vector.shape_cast %32 : vector<8x8xbf16> to vector<1x8x8xbf16>
    tpu.vector_store %arg7[%c6, %c0_19, %c0_20], %35 {strides = array<i32>} : memref<12x8x8xbf16, #tpu.memory_space<vmem>>, vector<1x8x8xbf16>,
    %36 = vector.extract_strided_slice %7 {offsets = [0, 56], sizes = [8, 8], strides = [1, 1]} : vector<8x96xbf16> to vector<8x8xbf16>
    %c7 = arith.constant 7 : index
    %c0_21 = arith.constant 0 : index
    %c0_22 = arith.constant 0 : index
    %37 = vector.load %arg7[%c7, %c0_21, %c0_22] : memref<12x8x8xbf16, #tpu.memory_space<vmem>>, vector<1x8x8xbf16>
    %38 = vector.shape_cast %37 : vector<1x8x8xbf16> to vector<8x8xbf16>
    %39 = vector.shape_cast %36 : vector<8x8xbf16> to vector<1x8x8xbf16>
    tpu.vector_store %arg7[%c7, %c0_21, %c0_22], %39 {strides = array<i32>} : memref<12x8x8xbf16, #tpu.memory_space<vmem>>, vector<1x8x8xbf16>,
    %40 = vector.extract_strided_slice %7 {offsets = [0, 64], sizes = [8, 8], strides = [1, 1]} : vector<8x96xbf16> to vector<8x8xbf16>
    %c8 = arith.constant 8 : index
    %c0_23 = arith.constant 0 : index
    %c0_24 = arith.constant 0 : index
    %41 = vector.load %arg7[%c8, %c0_23, %c0_24] : memref<12x8x8xbf16, #tpu.memory_space<vmem>>, vector<1x8x8xbf16>
    %42 = vector.shape_cast %41 : vector<1x8x8xbf16> to vector<8x8xbf16>
    %43 = vector.shape_cast %40 : vector<8x8xbf16> to vector<1x8x8xbf16>
    tpu.vector_store %arg7[%c8, %c0_23, %c0_24], %43 {strides = array<i32>} : memref<12x8x8xbf16, #tpu.memory_space<vmem>>, vector<1x8x8xbf16>,
    %44 = vector.extract_strided_slice %7 {offsets = [0, 72], sizes = [8, 8], strides = [1, 1]} : vector<8x96xbf16> to vector<8x8xbf16>
    %c9 = arith.constant 9 : index
    %c0_25 = arith.constant 0 : index
    %c0_26 = arith.constant 0 : index
    %45 = vector.load %arg7[%c9, %c0_25, %c0_26] : memref<12x8x8xbf16, #tpu.memory_space<vmem>>, vector<1x8x8xbf16>
    %46 = vector.shape_cast %45 : vector<1x8x8xbf16> to vector<8x8xbf16>
    %47 = vector.shape_cast %44 : vector<8x8xbf16> to vector<1x8x8xbf16>
    tpu.vector_store %arg7[%c9, %c0_25, %c0_26], %47 {strides = array<i32>} : memref<12x8x8xbf16, #tpu.memory_space<vmem>>, vector<1x8x8xbf16>,
    %48 = vector.extract_strided_slice %7 {offsets = [0, 80], sizes = [8, 8], strides = [1, 1]} : vector<8x96xbf16> to vector<8x8xbf16>
    %c10 = arith.constant 10 : index
    %c0_27 = arith.constant 0 : index
    %c0_28 = arith.constant 0 : index
    %49 = vector.load %arg7[%c10, %c0_27, %c0_28] : memref<12x8x8xbf16, #tpu.memory_space<vmem>>, vector<1x8x8xbf16>
    %50 = vector.shape_cast %49 : vector<1x8x8xbf16> to vector<8x8xbf16>
    %51 = vector.shape_cast %48 : vector<8x8xbf16> to vector<1x8x8xbf16>
    tpu.vector_store %arg7[%c10, %c0_27, %c0_28], %51 {strides = array<i32>} : memref<12x8x8xbf16, #tpu.memory_space<vmem>>, vector<1x8x8xbf16>,
    %52 = vector.extract_strided_slice %7 {offsets = [0, 88], sizes = [8, 8], strides = [1, 1]} : vector<8x96xbf16> to vector<8x8xbf16>
    %c11 = arith.constant 11 : index
    %c0_29 = arith.constant 0 : index
    %c0_30 = arith.constant 0 : index
    %53 = vector.load %arg7[%c11, %c0_29, %c0_30] : memref<12x8x8xbf16, #tpu.memory_space<vmem>>, vector<1x8x8xbf16>
    %54 = vector.shape_cast %53 : vector<1x8x8xbf16> to vector<8x8xbf16>
    %55 = vector.shape_cast %52 : vector<8x8xbf16> to vector<1x8x8xbf16>
    tpu.vector_store %arg7[%c11, %c0_29, %c0_30], %55 {strides = array<i32>} : memref<12x8x8xbf16, #tpu.memory_space<vmem>>, vector<1x8x8xbf16>,
    %56 = tpu.iota {dimensions = array<i32: 0>} : vector<8x8xi32>
    %57 = tpu.iota {dimensions = array<i32: 1>} : vector<8x8xi32>
    %58 = arith.cmpi slt, %57, %56 : vector<8x8xi32>
    %cst_31 = arith.constant -1.000000e+30 : f32
    %cst_32 = arith.constant 0.000000e+00 : f32
    %59 = vector.broadcast %cst_31 : f32 to vector<8x8xf32>
    %60 = vector.broadcast %cst_32 : f32 to vector<8x8xf32>
    %61 = arith.select %58, %59, %60 : vector<8x8xi1>, vector<8x8xf32>
    %c0_i32 = arith.constant 0 : i32
    %c4_i32 = arith.constant 4 : i32
    %62 = arith.addi %c0_i32, %c4_i32 : i32
    %c1_i32 = arith.constant 1 : i32
    scf.for %arg10 = %c0_i32 to %62 step %c1_i32  : i32 {
      %84 = arith.index_cast %arg10 : i32 to index
      %c0_62 = arith.constant 0 : index
      %c0_63 = arith.constant 0 : index
      %85 = vector.load %arg7[%84, %c0_62, %c0_63] : memref<12x8x8xbf16, #tpu.memory_space<vmem>>, vector<1x8x8xbf16>
      %86 = vector.shape_cast %85 : vector<1x8x8xbf16> to vector<8x8xbf16>
      %c4_i32_64 = arith.constant 4 : i32
      %87 = arith.addi %c4_i32_64, %arg10 : i32
      %88 = arith.index_cast %87 : i32 to index
      %c0_65 = arith.constant 0 : index
      %c0_66 = arith.constant 0 : index
      %89 = vector.load %arg7[%88, %c0_65, %c0_66] : memref<12x8x8xbf16, #tpu.memory_space<vmem>>, vector<1x8x8xbf16>
      %90 = vector.shape_cast %89 : vector<1x8x8xbf16> to vector<8x8xbf16>
      %c8_i32 = arith.constant 8 : i32
      %91 = arith.addi %c8_i32, %arg10 : i32
      %92 = arith.index_cast %91 : i32 to index
      %c0_67 = arith.constant 0 : index
      %c0_68 = arith.constant 0 : index
      %93 = vector.load %arg7[%92, %c0_67, %c0_68] : memref<12x8x8xbf16, #tpu.memory_space<vmem>>, vector<1x8x8xbf16>
      %94 = vector.shape_cast %93 : vector<1x8x8xbf16> to vector<8x8xbf16>
      %cst_69 = arith.constant dense<0.000000e+00> : vector<8x8xf32>
      %95 = tpu.matmul %86, %90, %cst_69 {dimension_numbers = #tpu.dot_dimension_numbers<[1], [1], [0], [0], [0, 0, 1, 0], [], []>} : vector<8x8xbf16>, vector<8x8xbf16>, vector<8x8xf32> -> vector<8x8xf32>
      %96 = arith.addf %95, %61 : vector<8x8xf32>
      %cst_70 = arith.constant dense<0xFF800000> : vector<8xf32>
      %97 = vector.multi_reduction <maximumf>, %96, %cst_70 [1] : vector<8x8xf32> to vector<8xf32>
      %98 = vector.shape_cast %97 : vector<8xf32> to vector<8x1xf32>
      %99 = vector.broadcast %98 : vector<8x1xf32> to vector<8x8xf32>
      %100 = arith.subf %96, %99 : vector<8x8xf32>
      %101 = math.exp %100 : vector<8x8xf32>
      %cst_71 = arith.constant dense<0.000000e+00> : vector<8xf32>
      %102 = vector.multi_reduction <add>, %101, %cst_71 [1] : vector<8x8xf32> to vector<8xf32>
      %103 = vector.shape_cast %102 : vector<8xf32> to vector<8x1xf32>
      %104 = arith.truncf %101 : vector<8x8xf32> to vector<8x8xbf16>
      %cst_72 = arith.constant dense<0.000000e+00> : vector<8x8xf32>
      %105 = tpu.matmul %104, %94, %cst_72 {dimension_numbers = #tpu.dot_dimension_numbers<[1], [0], [0], [1], [0, 0, 1, 1], [], []>} : vector<8x8xbf16>, vector<8x8xbf16>, vector<8x8xf32> -> vector<8x8xf32>
      %106 = tpu.reciprocal %103 {approx = true} : vector<8x1xf32> -> vector<8x1xf32>
      %107 = vector.broadcast %106 : vector<8x1xf32> to vector<8x8xf32>
      %108 = arith.mulf %105, %107 : vector<8x8xf32>
      %109 = arith.truncf %108 : vector<8x8xf32> to vector<8x8xbf16>
      %110 = arith.index_cast %arg10 : i32 to index
      %c0_73 = arith.constant 0 : index
      %c0_74 = arith.constant 0 : index
      %111 = vector.load %arg8[%110, %c0_73, %c0_74] : memref<4x8x8xbf16, #tpu.memory_space<vmem>>, vector<1x8x8xbf16>
      %112 = vector.shape_cast %111 : vector<1x8x8xbf16> to vector<8x8xbf16>
      %113 = vector.shape_cast %109 : vector<8x8xbf16> to vector<1x8x8xbf16>
      tpu.vector_store %arg8[%110, %c0_73, %c0_74], %113 {strides = array<i32>} : memref<4x8x8xbf16, #tpu.memory_space<vmem>>, vector<1x8x8xbf16>,
    }
    %c4_i32_33 = arith.constant 4 : i32
    %c0_34 = arith.constant 0 : index
    %c0_35 = arith.constant 0 : index
    %c0_36 = arith.constant 0 : index
    %63 = vector.load %arg8[%c0_34, %c0_35, %c0_36] : memref<4x8x8xbf16, #tpu.memory_space<vmem>>, vector<1x8x8xbf16>
    %64 = vector.shape_cast %63 : vector<1x8x8xbf16> to vector<8x8xbf16>
    %c0_37 = arith.constant 0 : index
    %c0_38 = arith.constant 0 : index
    %65 = vector.load %arg9[%c0_37, %c0_38] : memref<8x32xbf16, #tpu.memory_space<vmem>>, vector<8x8xbf16>
    tpu.vector_store %arg9[%c0_37, %c0_38], %64 {strides = array<i32>} : memref<8x32xbf16, #tpu.memory_space<vmem>>, vector<8x8xbf16>,
    %c1_39 = arith.constant 1 : index
    %c0_40 = arith.constant 0 : index
    %c0_41 = arith.constant 0 : index
    %66 = vector.load %arg8[%c1_39, %c0_40, %c0_41] : memref<4x8x8xbf16, #tpu.memory_space<vmem>>, vector<1x8x8xbf16>
    %67 = vector.shape_cast %66 : vector<1x8x8xbf16> to vector<8x8xbf16>
    %c0_42 = arith.constant 0 : index
    %c8_43 = arith.constant 8 : index
    %68 = vector.load %arg9[%c0_42, %c8_43] : memref<8x32xbf16, #tpu.memory_space<vmem>>, vector<8x8xbf16>
    tpu.vector_store %arg9[%c0_42, %c8_43], %67 {strides = array<i32>} : memref<8x32xbf16, #tpu.memory_space<vmem>>, vector<8x8xbf16>,
    %c2_44 = arith.constant 2 : index
    %c0_45 = arith.constant 0 : index
    %c0_46 = arith.constant 0 : index
    %69 = vector.load %arg8[%c2_44, %c0_45, %c0_46] : memref<4x8x8xbf16, #tpu.memory_space<vmem>>, vector<1x8x8xbf16>
    %70 = vector.shape_cast %69 : vector<1x8x8xbf16> to vector<8x8xbf16>
    %c0_47 = arith.constant 0 : index
    %c16 = arith.constant 16 : index
    %71 = vector.load %arg9[%c0_47, %c16] : memref<8x32xbf16, #tpu.memory_space<vmem>>, vector<8x8xbf16>
    tpu.vector_store %arg9[%c0_47, %c16], %70 {strides = array<i32>} : memref<8x32xbf16, #tpu.memory_space<vmem>>, vector<8x8xbf16>,
    %c3_48 = arith.constant 3 : index
    %c0_49 = arith.constant 0 : index
    %c0_50 = arith.constant 0 : index
    %72 = vector.load %arg8[%c3_48, %c0_49, %c0_50] : memref<4x8x8xbf16, #tpu.memory_space<vmem>>, vector<1x8x8xbf16>
    %73 = vector.shape_cast %72 : vector<1x8x8xbf16> to vector<8x8xbf16>
    %c0_51 = arith.constant 0 : index
    %c24 = arith.constant 24 : index
    %74 = vector.load %arg9[%c0_51, %c24] : memref<8x32xbf16, #tpu.memory_space<vmem>>, vector<8x8xbf16>
    tpu.vector_store %arg9[%c0_51, %c24], %73 {strides = array<i32>} : memref<8x32xbf16, #tpu.memory_space<vmem>>, vector<8x8xbf16>,
    %c0_52 = arith.constant 0 : index
    %c0_53 = arith.constant 0 : index
    %75 = vector.load %arg9[%c0_52, %c0_53] : memref<8x32xbf16, #tpu.memory_space<vmem>>, vector<8x32xbf16>
    %c0_54 = arith.constant 0 : index
    %c0_55 = arith.constant 0 : index
    %76 = vector.load %arg4[%c0_54, %c0_55] : memref<32x32xbf16, #tpu.memory_space<vmem>>, vector<32x32xbf16>
    %cst_56 = arith.constant dense<0.000000e+00> : vector<8x32xf32>
    %77 = tpu.matmul %75, %76, %cst_56 {dimension_numbers = #tpu.dot_dimension_numbers<[1], [0], [0], [1], [0, 0, 1, 1], [], []>} : vector<8x32xbf16>, vector<32x32xbf16>, vector<8x32xf32> -> vector<8x32xf32>
    %c0_57 = arith.constant 0 : index
    %c0_58 = arith.constant 0 : index
    %78 = vector.load %arg5[%c0_57, %c0_58] : memref<1x32xf32, #tpu.memory_space<vmem>>, vector<1x32xf32>
    %79 = vector.broadcast %78 : vector<1x32xf32> to vector<8x32xf32>
    %80 = arith.addf %77, %79 : vector<8x32xf32>
    %c0_59 = arith.constant 0 : index
    %c0_60 = arith.constant 0 : index
    %c0_61 = arith.constant 0 : index
    %81 = vector.load %arg6[%c0_59, %c0_60, %c0_61] : memref<1x8x32xf32, #tpu.memory_space<vmem>>, vector<1x8x32xf32>
    %82 = vector.shape_cast %81 : vector<1x8x32xf32> to vector<8x32xf32>
    %83 = vector.shape_cast %80 : vector<8x32xf32> to vector<1x8x32xf32>
    tpu.vector_store %arg6[%c0_59, %c0_60, %c0_61], %83 {strides = array<i32>} : memref<1x8x32xf32, #tpu.memory_space<vmem>>, vector<1x8x32xf32>,
    return
  }
  func.func @transform_0(%arg0: i32) -> (i32, i32, i32) {
    %c0_i32 = arith.constant 0 : i32
    %c0_i32_0 = arith.constant 0 : i32
    %c0_i32_1 = arith.constant 0 : i32
    return %arg0, %c0_i32, %c0_i32_0 : i32, i32, i32
  }
  func.func @transform_1(%arg0: i32) -> (i32, i32) {
    %c0_i32 = arith.constant 0 : i32
    %c0_i32_0 = arith.constant 0 : i32
    %c0_i32_1 = arith.constant 0 : i32
    return %c0_i32, %c0_i32_0 : i32, i32
  }
  func.func @transform_2(%arg0: i32) -> (i32, i32) {
    %c0_i32 = arith.constant 0 : i32
    %c0_i32_0 = arith.constant 0 : i32
    %c0_i32_1 = arith.constant 0 : i32
    return %c0_i32, %c0_i32_0 : i32, i32
  }
  func.func @transform_3(%arg0: i32) -> (i32, i32) {
    %c0_i32 = arith.constant 0 : i32
    %c0_i32_0 = arith.constant 0 : i32
    %c0_i32_1 = arith.constant 0 : i32
    return %c0_i32, %c0_i32_0 : i32, i32
  }
  func.func @transform_4(%arg0: i32) -> (i32, i32) {
    %c0_i32 = arith.constant 0 : i32
    %c0_i32_0 = arith.constant 0 : i32
    %c0_i32_1 = arith.constant 0 : i32
    return %c0_i32, %c0_i32_0 : i32, i32
  }
  func.func @transform_5(%arg0: i32) -> (i32, i32, i32) {
    %c0_i32 = arith.constant 0 : i32
    %c0_i32_0 = arith.constant 0 : i32
    %c0_i32_1 = arith.constant 0 : i32
    return %arg0, %c0_i32, %c0_i32_0 : i32, i32, i32
  }
}

module attributes {stable_mosaic.version = 11 : i64} {
  func.func @_attn_kernel(%arg0: i32, %arg1: memref<1x8x32xbf16, #tpu.memory_space<vmem>>, %arg2: memref<32x96xbf16, #tpu.memory_space<vmem>>, %arg3: memref<1x96xf32, #tpu.memory_space<vmem>>, %arg4: memref<32x32xbf16, #tpu.memory_space<vmem>>, %arg5: memref<1x32xf32, #tpu.memory_space<vmem>>, %arg6: memref<1x8x32xf32, #tpu.memory_space<vmem>>, %arg7: memref<12x8x8xbf16, #tpu.memory_space<vmem>>, %arg8: memref<4x8x8xbf16, #tpu.memory_space<vmem>>, %arg9: memref<8x32xbf16, #tpu.memory_space<vmem>>) attributes {dimension_semantics = [#tpu.dimension_semantics<parallel>], iteration_bounds = array<i64: 2>, scalar_prefetch = 0 : i64, scratch_operands = 3 : i64, tpu.core_type = #tpu.core_type<tc>, window_params = [{transform_indices = @transform_0, window_bounds = array<i64: 1, 8, 32>}, {pipeline_mode = #tpu.pipeline_mode<synchronous>, transform_indices = @transform_1, window_bounds = array<i64: 32, 96>}, {pipeline_mode = #tpu.pipeline_mode<synchronous>, transform_indices = @transform_2, window_bounds = array<i64: 1, 96>}, {pipeline_mode = #tpu.pipeline_mode<synchronous>, transform_indices = @transform_3, window_bounds = array<i64: 32, 32>}, {pipeline_mode = #tpu.pipeline_mode<synchronous>, transform_indices = @transform_4, window_bounds = array<i64: 1, 32>}, {transform_indices = @transform_5, window_bounds = array<i64: 1, 8, 32>}]} {
    %c0 = arith.constant 0 : index
    %c0_0 = arith.constant 0 : index
    %c0_1 = arith.constant 0 : index
    %0 = vector.load %arg1[%c0, %c0_0, %c0_1] : memref<1x8x32xbf16, #tpu.memory_space<vmem>>, vector<1x8x32xbf16>
    %1 = vector.shape_cast %0 : vector<1x8x32xbf16> to vector<8x32xbf16>
    %c0_2 = arith.constant 0 : index
    %c0_3 = arith.constant 0 : index
    %2 = vector.load %arg2[%c0_2, %c0_3] : memref<32x96xbf16, #tpu.memory_space<vmem>>, vector<32x96xbf16>
    %cst = arith.constant dense<0.000000e+00> : vector<8x96xf32>
    %3 = tpu.matmul %1, %2, %cst {dimension_numbers = #tpu.dot_dimension_numbers<[1], [0], [0], [1], [0, 0, 1, 1], [], []>} : vector<8x32xbf16>, vector<32x96xbf16>, vector<8x96xf32> -> vector<8x96xf32>
    %c0_4 = arith.constant 0 : index
    %c0_5 = arith.constant 0 : index
    %4 = vector.load %arg3[%c0_4, %c0_5] : memref<1x96xf32, #tpu.memory_space<vmem>>, vector<1x96xf32>
    %5 = vector.broadcast %4 : vector<1x96xf32> to vector<8x96xf32>
    %6 = arith.addf %3, %5 : vector<8x96xf32>
    %7 = arith.truncf %6 : vector<8x96xf32> to vector<8x96xbf16>
    %8 = vector.extract_strided_slice %7 {offsets = [0, 0], sizes = [8, 8], strides = [1, 1]} : vector<8x96xbf16> to vector<8x8xbf16>
    %c0_6 = arith.constant 0 : index
    %c0_7 = arith.constant 0 : index
    %c0_8 = arith.constant 0 : index
    %9 = vector.load %arg7[%c0_6, %c0_7, %c0_8] : memref<12x8x8xbf16, #tpu.memory_space<vmem>>, vector<1x8x8xbf16>
    %10 = vector.shape_cast %9 : vector<1x8x8xbf16> to vector<8x8xbf16>
    %11 = vector.shape_cast %8 : vector<8x8xbf16> to vector<1x8x8xbf16>
    tpu.vector_store %arg7[%c0_6, %c0_7, %c0_8], %11 {strides = array<i32>} : memref<12x8x8xbf16, #tpu.memory_space<vmem>>, vector<1x8x8xbf16>,
    %12 = vector.extract_strided_slice %7 {offsets = [0, 8], sizes = [8, 8], strides = [1, 1]} : vector<8x96xbf16> to vector<8x8xbf16>
    %c1 = arith.constant 1 : index
    %c0_9 = arith.constant 0 : index
    %c0_10 = arith.constant 0 : index
    %13 = vector.load %arg7[%c1, %c0_9, %c0_10] : memref<12x8x8xbf16, #tpu.memory_space<vmem>>, vector<1x8x8xbf16>
    %14 = vector.shape_cast %13 : vector<1x8x8xbf16> to vector<8x8xbf16>
    %15 = vector.shape_cast %12 : vector<8x8xbf16> to vector<1x8x8xbf16>
    tpu.vector_store %arg7[%c1, %c0_9, %c0_10], %15 {strides = array<i32>} : memref<12x8x8xbf16, #tpu.memory_space<vmem>>, vector<1x8x8xbf16>,
    %16 = vector.extract_strided_slice %7 {offsets = [0, 16], sizes = [8, 8], strides = [1, 1]} : vector<8x96xbf16> to vector<8x8xbf16>
    %c2 = arith.constant 2 : index
    %c0_11 = arith.constant 0 : index
    %c0_12 = arith.constant 0 : index
    %17 = vector.load %arg7[%c2, %c0_11, %c0_12] : memref<12x8x8xbf16, #tpu.memory_space<vmem>>, vector<1x8x8xbf16>
    %18 = vector.shape_cast %17 : vector<1x8x8xbf16> to vector<8x8xbf16>
    %19 = vector.shape_cast %16 : vector<8x8xbf16> to vector<1x8x8xbf16>
    tpu.vector_store %arg7[%c2, %c0_11, %c0_12], %19 {strides = array<i32>} : memref<12x8x8xbf16, #tpu.memory_space<vmem>>, vector<1x8x8xbf16>,
    %20 = vector.extract_strided_slice %7 {offsets = [0, 24], sizes = [8, 8], strides = [1, 1]} : vector<8x96xbf16> to vector<8x8xbf16>
    %c3 = arith.constant 3 : index
    %c0_13 = arith.constant 0 : index
    %c0_14 = arith.constant 0 : index
    %21 = vector.load %arg7[%c3, %c0_13, %c0_14] : memref<12x8x8xbf16, #tpu.memory_space<vmem>>, vector<1x8x8xbf16>
    %22 = vector.shape_cast %21 : vector<1x8x8xbf16> to vector<8x8xbf16>
    %23 = vector.shape_cast %20 : vector<8x8xbf16> to vector<1x8x8xbf16>
    tpu.vector_store %arg7[%c3, %c0_13, %c0_14], %23 {strides = array<i32>} : memref<12x8x8xbf16, #tpu.memory_space<vmem>>, vector<1x8x8xbf16>,
    %24 = vector.extract_strided_slice %7 {offsets = [0, 32], sizes = [8, 8], strides = [1, 1]} : vector<8x96xbf16> to vector<8x8xbf16>
    %c4 = arith.constant 4 : index
    %c0_15 = arith.constant 0 : index
    %c0_16 = arith.constant 0 : index
    %25 = vector.load %arg7[%c4, %c0_15, %c0_16] : memref<12x8x8xbf16, #tpu.memory_space<vmem>>, vector<1x8x8xbf16>
    %26 = vector.shape_cast %25 : vector<1x8x8xbf16> to vector<8x8xbf16>
    %27 = vector.shape_cast %24 : vector<8x8xbf16> to vector<1x8x8xbf16>
    tpu.vector_store %arg7[%c4, %c0_15, %c0_16], %27 {strides = array<i32>} : memref<12x8x8xbf16, #tpu.memory_space<vmem>>, vector<1x8x8xbf16>,
    %28 = vector.extract_strided_slice %7 {offsets = [0, 40], sizes = [8, 8], strides = [1, 1]} : vector<8x96xbf16> to vector<8x8xbf16>
    %c5 = arith.constant 5 : index
    %c0_17 = arith.constant 0 : index
    %c0_18 = arith.constant 0 : index
    %29 = vector.load %arg7[%c5, %c0_17, %c0_18] : memref<12x8x8xbf16, #tpu.memory_space<vmem>>, vector<1x8x8xbf16>
    %30 = vector.shape_cast %29 : vector<1x8x8xbf16> to vector<8x8xbf16>
    %31 = vector.shape_cast %28 : vector<8x8xbf16> to vector<1x8x8xbf16>
    tpu.vector_store %arg7[%c5, %c0_17, %c0_18], %31 {strides = array<i32>} : memref<12x8x8xbf16, #tpu.memory_space<vmem>>, vector<1x8x8xbf16>,
    %32 = vector.extract_strided_slice %7 {offsets = [0, 48], sizes = [8, 8], strides = [1, 1]} : vector<8x96xbf16> to vector<8x8xbf16>
    %c6 = arith.constant 6 : index
    %c0_19 = arith.constant 0 : index
    %c0_20 = arith.constant 0 : index
    %33 = vector.load %arg7[%c6, %c0_19, %c0_20] : memref<12x8x8xbf16, #tpu.memory_space<vmem>>, vector<1x8x8xbf16>
    %34 = vector.shape_cast %33 : vector<1x8x8xbf16> to vector<8x8xbf16>
    %35 = vector.shape_cast %32 : vector<8x8xbf16> to vector<1x8x8xbf16>
    tpu.vector_store %arg7[%c6, %c0_19, %c0_20], %35 {strides = array<i32>} : memref<12x8x8xbf16, #tpu.memory_space<vmem>>, vector<1x8x8xbf16>,
    %36 = vector.extract_strided_slice %7 {offsets = [0, 56], sizes = [8, 8], strides = [1, 1]} : vector<8x96xbf16> to vector<8x8xbf16>
    %c7 = arith.constant 7 : index
    %c0_21 = arith.constant 0 : index
    %c0_22 = arith.constant 0 : index
    %37 = vector.load %arg7[%c7, %c0_21, %c0_22] : memref<12x8x8xbf16, #tpu.memory_space<vmem>>, vector<1x8x8xbf16>
    %38 = vector.shape_cast %37 : vector<1x8x8xbf16> to vector<8x8xbf16>
    %39 = vector.shape_cast %36 : vector<8x8xbf16> to vector<1x8x8xbf16>
    tpu.vector_store %arg7[%c7, %c0_21, %c0_22], %39 {strides = array<i32>} : memref<12x8x8xbf16, #tpu.memory_space<vmem>>, vector<1x8x8xbf16>,
    %40 = vector.extract_strided_slice %7 {offsets = [0, 64], sizes = [8, 8], strides = [1, 1]} : vector<8x96xbf16> to vector<8x8xbf16>
    %c8 = arith.constant 8 : index
    %c0_23 = arith.constant 0 : index
    %c0_24 = arith.constant 0 : index
    %41 = vector.load %arg7[%c8, %c0_23, %c0_24] : memref<12x8x8xbf16, #tpu.memory_space<vmem>>, vector<1x8x8xbf16>
    %42 = vector.shape_cast %41 : vector<1x8x8xbf16> to vector<8x8xbf16>
    %43 = vector.shape_cast %40 : vector<8x8xbf16> to vector<1x8x8xbf16>
    tpu.vector_store %arg7[%c8, %c0_23, %c0_24], %43 {strides = array<i32>} : memref<12x8x8xbf16, #tpu.memory_space<vmem>>, vector<1x8x8xbf16>,
    %44 = vector.extract_strided_slice %7 {offsets = [0, 72], sizes = [8, 8], strides = [1, 1]} : vector<8x96xbf16> to vector<8x8xbf16>
    %c9 = arith.constant 9 : index
    %c0_25 = arith.constant 0 : index
    %c0_26 = arith.constant 0 : index
    %45 = vector.load %arg7[%c9, %c0_25, %c0_26] : memref<12x8x8xbf16, #tpu.memory_space<vmem>>, vector<1x8x8xbf16>
    %46 = vector.shape_cast %45 : vector<1x8x8xbf16> to vector<8x8xbf16>
    %47 = vector.shape_cast %44 : vector<8x8xbf16> to vector<1x8x8xbf16>
    tpu.vector_store %arg7[%c9, %c0_25, %c0_26], %47 {strides = array<i32>} : memref<12x8x8xbf16, #tpu.memory_space<vmem>>, vector<1x8x8xbf16>,
    %48 = vector.extract_strided_slice %7 {offsets = [0, 80], sizes = [8, 8], strides = [1, 1]} : vector<8x96xbf16> to vector<8x8xbf16>
    %c10 = arith.constant 10 : index
    %c0_27 = arith.constant 0 : index
    %c0_28 = arith.constant 0 : index
    %49 = vector.load %arg7[%c10, %c0_27, %c0_28] : memref<12x8x8xbf16, #tpu.memory_space<vmem>>, vector<1x8x8xbf16>
    %50 = vector.shape_cast %49 : vector<1x8x8xbf16> to vector<8x8xbf16>
    %51 = vector.shape_cast %48 : vector<8x8xbf16> to vector<1x8x8xbf16>
    tpu.vector_store %arg7[%c10, %c0_27, %c0_28], %51 {strides = array<i32>} : memref<12x8x8xbf16, #tpu.memory_space<vmem>>, vector<1x8x8xbf16>,
    %52 = vector.extract_strided_slice %7 {offsets = [0, 88], sizes = [8, 8], strides = [1, 1]} : vector<8x96xbf16> to vector<8x8xbf16>
    %c11 = arith.constant 11 : index
    %c0_29 = arith.constant 0 : index
    %c0_30 = arith.constant 0 : index
    %53 = vector.load %arg7[%c11, %c0_29, %c0_30] : memref<12x8x8xbf16, #tpu.memory_space<vmem>>, vector<1x8x8xbf16>
    %54 = vector.shape_cast %53 : vector<1x8x8xbf16> to vector<8x8xbf16>
    %55 = vector.shape_cast %52 : vector<8x8xbf16> to vector<1x8x8xbf16>
    tpu.vector_store %arg7[%c11, %c0_29, %c0_30], %55 {strides = array<i32>} : memref<12x8x8xbf16, #tpu.memory_space<vmem>>, vector<1x8x8xbf16>,
    %56 = tpu.iota {dimensions = array<i32: 0>} : vector<8x8xi32>
    %57 = tpu.iota {dimensions = array<i32: 1>} : vector<8x8xi32>
    %58 = arith.cmpi slt, %57, %56 : vector<8x8xi32>
    %cst_31 = arith.constant -1.000000e+30 : f32
    %cst_32 = arith.constant 0.000000e+00 : f32
    %59 = vector.broadcast %cst_31 : f32 to vector<8x8xf32>
    %60 = vector.broadcast %cst_32 : f32 to vector<8x8xf32>
    %61 = arith.select %58, %59, %60 : vector<8x8xi1>, vector<8x8xf32>
    %c0_i32 = arith.constant 0 : i32
    %c4_i32 = arith.constant 4 : i32
    %62 = arith.addi %c0_i32, %c4_i32 : i32
    %c1_i32 = arith.constant 1 : i32
    scf.for %arg10 = %c0_i32 to %62 step %c1_i32  : i32 {
      %84 = arith.index_cast %arg10 : i32 to index
      %c0_62 = arith.constant 0 : index
      %c0_63 = arith.constant 0 : index
      %85 = vector.load %arg7[%84, %c0_62, %c0_63] : memref<12x8x8xbf16, #tpu.memory_space<vmem>>, vector<1x8x8xbf16>
      %86 = vector.shape_cast %85 : vector<1x8x8xbf16> to vector<8x8xbf16>
      %c4_i32_64 = arith.constant 4 : i32
      %87 = arith.addi %c4_i32_64, %arg10 : i32
      %88 = arith.index_cast %87 : i32 to index
      %c0_65 = arith.constant 0 : index
      %c0_66 = arith.constant 0 : index
      %89 = vector.load %arg7[%88, %c0_65, %c0_66] : memref<12x8x8xbf16, #tpu.memory_space<vmem>>, vector<1x8x8xbf16>
      %90 = vector.shape_cast %89 : vector<1x8x8xbf16> to vector<8x8xbf16>
      %c8_i32 = arith.constant 8 : i32
      %91 = arith.addi %c8_i32, %arg10 : i32
      %92 = arith.index_cast %91 : i32 to index
      %c0_67 = arith.constant 0 : index
      %c0_68 = arith.constant 0 : index
      %93 = vector.load %arg7[%92, %c0_67, %c0_68] : memref<12x8x8xbf16, #tpu.memory_space<vmem>>, vector<1x8x8xbf16>
      %94 = vector.shape_cast %93 : vector<1x8x8xbf16> to vector<8x8xbf16>
      %cst_69 = arith.constant dense<0.000000e+00> : vector<8x8xf32>
      %95 = tpu.matmul %86, %90, %cst_69 {dimension_numbers = #tpu.dot_dimension_numbers<[1], [1], [0], [0], [0, 0, 1, 0], [], []>} : vector<8x8xbf16>, vector<8x8xbf16>, vector<8x8xf32> -> vector<8x8xf32>
      %96 = arith.addf %95, %61 : vector<8x8xf32>
      %cst_70 = arith.constant dense<0xFF800000> : vector<8xf32>
      %97 = vector.multi_reduction <maximumf>, %96, %cst_70 [1] : vector<8x8xf32> to vector<8xf32>
      %98 = vector.shape_cast %97 : vector<8xf32> to vector<8x1xf32>
      %99 = vector.broadcast %98 : vector<8x1xf32> to vector<8x8xf32>
      %100 = arith.subf %96, %99 : vector<8x8xf32>
      %101 = math.exp %100 : vector<8x8xf32>
      %cst_71 = arith.constant dense<0.000000e+00> : vector<8xf32>
      %102 = vector.multi_reduction <add>, %101, %cst_71 [1] : vector<8x8xf32> to vector<8xf32>
      %103 = vector.shape_cast %102 : vector<8xf32> to vector<8x1xf32>
      %104 = arith.truncf %101 : vector<8x8xf32> to vector<8x8xbf16>
      %cst_72 = arith.constant dense<0.000000e+00> : vector<8x8xf32>
      %105 = tpu.matmul %104, %94, %cst_72 {dimension_numbers = #tpu.dot_dimension_numbers<[1], [0], [0], [1], [0, 0, 1, 1], [], []>} : vector<8x8xbf16>, vector<8x8xbf16>, vector<8x8xf32> -> vector<8x8xf32>
      %106 = tpu.reciprocal %103 {approx = true} : vector<8x1xf32> -> vector<8x1xf32>
      %107 = vector.broadcast %106 : vector<8x1xf32> to vector<8x8xf32>
      %108 = arith.mulf %105, %107 : vector<8x8xf32>
      %109 = arith.truncf %108 : vector<8x8xf32> to vector<8x8xbf16>
      %110 = arith.index_cast %arg10 : i32 to index
      %c0_73 = arith.constant 0 : index
      %c0_74 = arith.constant 0 : index
      %111 = vector.load %arg8[%110, %c0_73, %c0_74] : memref<4x8x8xbf16, #tpu.memory_space<vmem>>, vector<1x8x8xbf16>
      %112 = vector.shape_cast %111 : vector<1x8x8xbf16> to vector<8x8xbf16>
      %113 = vector.shape_cast %109 : vector<8x8xbf16> to vector<1x8x8xbf16>
      tpu.vector_store %arg8[%110, %c0_73, %c0_74], %113 {strides = array<i32>} : memref<4x8x8xbf16, #tpu.memory_space<vmem>>, vector<1x8x8xbf16>,
    }
    %c4_i32_33 = arith.constant 4 : i32
    %c0_34 = arith.constant 0 : index
    %c0_35 = arith.constant 0 : index
    %c0_36 = arith.constant 0 : index
    %63 = vector.load %arg8[%c0_34, %c0_35, %c0_36] : memref<4x8x8xbf16, #tpu.memory_space<vmem>>, vector<1x8x8xbf16>
    %64 = vector.shape_cast %63 : vector<1x8x8xbf16> to vector<8x8xbf16>
    %c0_37 = arith.constant 0 : index
    %c0_38 = arith.constant 0 : index
    %65 = vector.load %arg9[%c0_37, %c0_38] : memref<8x32xbf16, #tpu.memory_space<vmem>>, vector<8x8xbf16>
    tpu.vector_store %arg9[%c0_37, %c0_38], %64 {strides = array<i32>} : memref<8x32xbf16, #tpu.memory_space<vmem>>, vector<8x8xbf16>,
    %c1_39 = arith.constant 1 : index
    %c0_40 = arith.constant 0 : index
    %c0_41 = arith.constant 0 : index
    %66 = vector.load %arg8[%c1_39, %c0_40, %c0_41] : memref<4x8x8xbf16, #tpu.memory_space<vmem>>, vector<1x8x8xbf16>
    %67 = vector.shape_cast %66 : vector<1x8x8xbf16> to vector<8x8xbf16>
    %c0_42 = arith.constant 0 : index
    %c8_43 = arith.constant 8 : index
    %68 = vector.load %arg9[%c0_42, %c8_43] : memref<8x32xbf16, #tpu.memory_space<vmem>>, vector<8x8xbf16>
    tpu.vector_store %arg9[%c0_42, %c8_43], %67 {strides = array<i32>} : memref<8x32xbf16, #tpu.memory_space<vmem>>, vector<8x8xbf16>,
    %c2_44 = arith.constant 2 : index
    %c0_45 = arith.constant 0 : index
    %c0_46 = arith.constant 0 : index
    %69 = vector.load %arg8[%c2_44, %c0_45, %c0_46] : memref<4x8x8xbf16, #tpu.memory_space<vmem>>, vector<1x8x8xbf16>
    %70 = vector.shape_cast %69 : vector<1x8x8xbf16> to vector<8x8xbf16>
    %c0_47 = arith.constant 0 : index
    %c16 = arith.constant 16 : index
    %71 = vector.load %arg9[%c0_47, %c16] : memref<8x32xbf16, #tpu.memory_space<vmem>>, vector<8x8xbf16>
    tpu.vector_store %arg9[%c0_47, %c16], %70 {strides = array<i32>} : memref<8x32xbf16, #tpu.memory_space<vmem>>, vector<8x8xbf16>,
    %c3_48 = arith.constant 3 : index
    %c0_49 = arith.constant 0 : index
    %c0_50 = arith.constant 0 : index
    %72 = vector.load %arg8[%c3_48, %c0_49, %c0_50] : memref<4x8x8xbf16, #tpu.memory_space<vmem>>, vector<1x8x8xbf16>
    %73 = vector.shape_cast %72 : vector<1x8x8xbf16> to vector<8x8xbf16>
    %c0_51 = arith.constant 0 : index
    %c24 = arith.constant 24 : index
    %74 = vector.load %arg9[%c0_51, %c24] : memref<8x32xbf16, #tpu.memory_space<vmem>>, vector<8x8xbf16>
    tpu.vector_store %arg9[%c0_51, %c24], %73 {strides = array<i32>} : memref<8x32xbf16, #tpu.memory_space<vmem>>, vector<8x8xbf16>,
    %c0_52 = arith.constant 0 : index
    %c0_53 = arith.constant 0 : index
    %75 = vector.load %arg9[%c0_52, %c0_53] : memref<8x32xbf16, #tpu.memory_space<vmem>>, vector<8x32xbf16>
    %c0_54 = arith.constant 0 : index
    %c0_55 = arith.constant 0 : index
    %76 = vector.load %arg4[%c0_54, %c0_55] : memref<32x32xbf16, #tpu.memory_space<vmem>>, vector<32x32xbf16>
    %cst_56 = arith.constant dense<0.000000e+00> : vector<8x32xf32>
    %77 = tpu.matmul %75, %76, %cst_56 {dimension_numbers = #tpu.dot_dimension_numbers<[1], [0], [0], [1], [0, 0, 1, 1], [], []>} : vector<8x32xbf16>, vector<32x32xbf16>, vector<8x32xf32> -> vector<8x32xf32>
    %c0_57 = arith.constant 0 : index
    %c0_58 = arith.constant 0 : index
    %78 = vector.load %arg5[%c0_57, %c0_58] : memref<1x32xf32, #tpu.memory_space<vmem>>, vector<1x32xf32>
    %79 = vector.broadcast %78 : vector<1x32xf32> to vector<8x32xf32>
    %80 = arith.addf %77, %79 : vector<8x32xf32>
    %c0_59 = arith.constant 0 : index
    %c0_60 = arith.constant 0 : index
    %c0_61 = arith.constant 0 : index
    %81 = vector.load %arg6[%c0_59, %c0_60, %c0_61] : memref<1x8x32xf32, #tpu.memory_space<vmem>>, vector<1x8x32xf32>
    %82 = vector.shape_cast %81 : vector<1x8x32xf32> to vector<8x32xf32>
    %83 = vector.shape_cast %80 : vector<8x32xf32> to vector<1x8x32xf32>
    tpu.vector_store %arg6[%c0_59, %c0_60, %c0_61], %83 {strides = array<i32>} : memref<1x8x32xf32, #tpu.memory_space<vmem>>, vector<1x8x32xf32>,
    return
  }
  func.func @transform_0(%arg0: i32) -> (i32, i32, i32) {
    %c0_i32 = arith.constant 0 : i32
    %c0_i32_0 = arith.constant 0 : i32
    %c0_i32_1 = arith.constant 0 : i32
    return %arg0, %c0_i32, %c0_i32_0 : i32, i32, i32
  }
  func.func @transform_1(%arg0: i32) -> (i32, i32) {
    %c0_i32 = arith.constant 0 : i32
    %c0_i32_0 = arith.constant 0 : i32
    %c0_i32_1 = arith.constant 0 : i32
    return %c0_i32, %c0_i32_0 : i32, i32
  }
  func.func @transform_2(%arg0: i32) -> (i32, i32) {
    %c0_i32 = arith.constant 0 : i32
    %c0_i32_0 = arith.constant 0 : i32
    %c0_i32_1 = arith.constant 0 : i32
    return %c0_i32, %c0_i32_0 : i32, i32
  }
  func.func @transform_3(%arg0: i32) -> (i32, i32) {
    %c0_i32 = arith.constant 0 : i32
    %c0_i32_0 = arith.constant 0 : i32
    %c0_i32_1 = arith.constant 0 : i32
    return %c0_i32, %c0_i32_0 : i32, i32
  }
  func.func @transform_4(%arg0: i32) -> (i32, i32) {
    %c0_i32 = arith.constant 0 : i32
    %c0_i32_0 = arith.constant 0 : i32
    %c0_i32_1 = arith.constant 0 : i32
    return %c0_i32, %c0_i32_0 : i32, i32
  }
  func.func @transform_5(%arg0: i32) -> (i32, i32, i32) {
    %c0_i32 = arith.constant 0 : i32
    %c0_i32_0 = arith.constant 0 : i32
    %c0_i32_1 = arith.constant 0 : i32
    return %arg0, %c0_i32, %c0_i32_0 : i32, i32, i32
  }
}

</mosaic_0001>

<llo_original>
// kernel: tpu_custom_call.1
$region0: #{tpu_custom_call.1}
  #allocation0 [shape = 'u32[]', space=smem, size = 0x4, offset = 0x4, fixed_abs, tag = 'smem constant byte address 0x4 - core index']
  #allocation1 [shape = 'u32[144,128]{1,0:T(1,128)}', space=vmem, size = 0x12000, scoped, tag = 'internal scratch']
  #allocation2 [shape = 'bf16[12,8,8]{2,1,0:T(8,128)(2,1)}', space=vmem, size = 0x6000, scoped, tag = 'scratch operand']
  #allocation3 [shape = 'bf16[4,8,8]{2,1,0:T(8,128)(2,1)}', space=vmem, size = 0x2000, scoped, tag = 'scratch operand']
  #allocation4 [shape = 'bf16[8,32]{1,0:T(8,128)(2,1)}', space=vmem, size = 0x800, scoped, tag = 'scratch operand']
  %s0 = inlined_call_operand.hbm [shape: bf16[2,8,32], index: 0, kind: input, shape index: {}]
  %s1 = inlined_call_operand.hbm [shape: bf16[32,96], index: 1, kind: input, shape index: {}]
  %s2 = inlined_call_operand.vmem [shape: f32[1,96], index: 2, kind: input, shape index: {}]
  %s3 = inlined_call_operand.hbm [shape: bf16[32,32], index: 3, kind: input, shape index: {}]
  %s4 = inlined_call_operand.vmem [shape: f32[1,32], index: 4, kind: input, shape index: {}]
  %s5 = inlined_call_operand.hbm [shape: f32[2,8,32], index: 5, kind: output, shape index: {}]
  %s6 = sld [smem:[#allocation0]]
  $region72: #{tpu_custom_call.1} parent=0
    _
  %s8 = ssub.s32 1, %s6
  %s9 = scalar_select 0, %s8, %s6
  $region1: #{tpu_custom_call.1} parent=0
    #allocation5 [shape = 'u8[4096]{0}', space=vmem, size = 0x1000, scoped, tag = 'input window, operand 0']
    #allocation6 [shape = 's32[2]{0}', space=sflag, size = 0x8, scoped, tag = 'scoped memory for tpu_custom_call.1']
    #allocation7 [shape = 's32[2]{0}', space=sflag, size = 0x8, scoped, tag = 'scoped memory for tpu_custom_call.1']
    #allocation8 [shape = 'u8[8192]{0}', space=vmem, size = 0x2000, scoped, tag = 'input window, operand 1, single buffered']
    #allocation9 [shape = 's32[1]{0}', space=sflag, size = 0x4, scoped, tag = 'scoped memory for tpu_custom_call.1']
    #allocation10 [shape = 'u8[8192]{0}', space=vmem, size = 0x2000, scoped, tag = 'input window, operand 3, single buffered']
    #allocation11 [shape = 'u8[8192]{0}', space=vmem, size = 0x2000, scoped, tag = 'output window, operand 0']
    %10 = vsyncpa [#allocation6], 0
    %s11 = scalar_lea.sflag [#allocation6], 1
    %12 = vsyncpa %s11, 0
    %13 = vsyncpa [#allocation9], 0
    %14 = vsyncpa [#allocation7], 0
    %s15 = scalar_lea.sflag [#allocation7], 1
    %16 = vsyncpa %s15, 0
    loop: start=0, step=1, limit=4
    $region2: #{tpu_custom_call.1} parent=1 // loop_pre_header
      _
    $region3: #{tpu_custom_call.1} parent=1 // loop_header
      %s18 = sphi 0, %s22
      %p19 = scmp.ge.s32.totalorder %s18, 4
      %s28 = sphi 0, %s30
      %s31 = sphi 0, %s28
      %s32 = sphi 0, %s31
      %s48 = sphi 0, %s32
      %s52 = sphi 0, %s52
      %s54 = sphi 0, %s52
      %s55 = sphi 0, %s54
      %s69 = sphi 0, %s55
      %s73 = sphi 0, %s73
      %s75 = sphi 0, %s73
      %s76 = sphi 0, %s75
      %s90 = sphi 0, %s76
      %s94 = sphi 0, %s94
      %s96 = sphi 0, %s94
      %s97 = sphi 0, %s96
      %s111 = sphi 0, %s97
      %s115 = sphi 0, %s115
      %s117 = sphi 0, %s115
      %s118 = sphi 0, %s117
      %s132 = sphi 0, %s118
      %s138 = sphi 0, %s140
      %s141 = sphi 0, %s138
      %s142 = sphi 0, %s141
      %s158 = sphi 0, %s142
    $region4: #{tpu_custom_call.1} parent=1 // loop_header_branch
      %21 = sbr.rel (%p19) target = $region8
    $region5: #{tpu_custom_call.1} parent=1 // loop_body
      %s23 = ssub.s32 %s18, 1
      %s24 = ssub.s32 %s18, 2
      %s25 = sadd.s32 %s18, 1
      %s26 = ssub.s32 %s18, %s25
      %p27 = scmp.eq.s32.totalorder %s26, 0
      %s29 = sadd.s32 %s28, 1
      %s30 = scalar_select %p27, %s28, %s29
      %p33 = pneg %p27
      %p34 = scmp.eq.s32.totalorder %s18, 1
      %p35 = por %p33, %p34
      %p36 = scmp.ne.s32.totalorder %s28, %s31
      %p37 = scmp.eq.s32.totalorder %s18, 0
      %p38 = por %p36, %p37
      %p39 = scmp.ne.s32.totalorder %s28, %s31
      %p40 = scmp.eq.s32.totalorder %s23, 1
      %p41 = por %p39, %p40
      %p42 = scmp.ne.s32.totalorder %s31, %s32
      %p43 = scmp.eq.s32.totalorder %s23, 0
      %p44 = por %p42, %p43
      %p45 = scmp.ne.s32.totalorder %s31, %s32
      %p46 = scmp.eq.s32.totalorder %s24, 1
      %p47 = por %p45, %p46
      %p49 = scmp.ne.s32.totalorder %s32, %s48
      %p50 = scmp.eq.s32.totalorder %s24, 0
      %p51 = por %p49, %p50
      %s53 = sadd.s32 %s52, 1
      %p56 = scmp.eq.s32.totalorder %s18, 1
      %p57 = scmp.ne.s32.totalorder %s52, %s54
      %p58 = scmp.eq.s32.totalorder %s18, 0
      %p59 = por %p57, %p58
      %p60 = scmp.ne.s32.totalorder %s52, %s54
      %p61 = scmp.eq.s32.totalorder %s23, 1
      %p62 = por %p60, %p61
      %p63 = scmp.ne.s32.totalorder %s54, %s55
      %p64 = scmp.eq.s32.totalorder %s23, 0
      %p65 = por %p63, %p64
      %p66 = scmp.ne.s32.totalorder %s54, %s55
      %p67 = scmp.eq.s32.totalorder %s24, 1
      %p68 = por %p66, %p67
      %p70 = scmp.ne.s32.totalorder %s55, %s69
      %p71 = scmp.eq.s32.totalorder %s24, 0
      %p72 = por %p70, %p71
      %s74 = sadd.s32 %s73, 1
      %p77 = scmp.eq.s32.totalorder %s18, 1
      %p78 = scmp.ne.s32.totalorder %s73, %s75
      %p79 = scmp.eq.s32.totalorder %s18, 0
      %p80 = por %p78, %p79
      %p81 = scmp.ne.s32.totalorder %s73, %s75
      %p82 = scmp.eq.s32.totalorder %s23, 1
      %p83 = por %p81, %p82
      %p84 = scmp.ne.s32.totalorder %s75, %s76
      %p85 = scmp.eq.s32.totalorder %s23, 0
      %p86 = por %p84, %p85
      %p87 = scmp.ne.s32.totalorder %s75, %s76
      %p88 = scmp.eq.s32.totalorder %s24, 1
      %p89 = por %p87, %p88
      %p91 = scmp.ne.s32.totalorder %s76, %s90
      %p92 = scmp.eq.s32.totalorder %s24, 0
      %p93 = por %p91, %p92
      %s95 = sadd.s32 %s94, 1
      %p98 = scmp.eq.s32.totalorder %s18, 1
      %p99 = scmp.ne.s32.totalorder %s94, %s96
      %p100 = scmp.eq.s32.totalorder %s18, 0
      %p101 = por %p99, %p100
      %p102 = scmp.ne.s32.totalorder %s94, %s96
      %p103 = scmp.eq.s32.totalorder %s23, 1
      %p104 = por %p102, %p103
      %p105 = scmp.ne.s32.totalorder %s96, %s97
      %p106 = scmp.eq.s32.totalorder %s23, 0
      %p107 = por %p105, %p106
      %p108 = scmp.ne.s32.totalorder %s96, %s97
      %p109 = scmp.eq.s32.totalorder %s24, 1
      %p110 = por %p108, %p109
      %p112 = scmp.ne.s32.totalorder %s97, %s111
      %p113 = scmp.eq.s32.totalorder %s24, 0
      %p114 = por %p112, %p113
      %s116 = sadd.s32 %s115, 1
      %p119 = scmp.eq.s32.totalorder %s18, 1
      %p120 = scmp.ne.s32.totalorder %s115, %s117
      %p121 = scmp.eq.s32.totalorder %s18, 0
      %p122 = por %p120, %p121
      %p123 = scmp.ne.s32.totalorder %s115, %s117
      %p124 = scmp.eq.s32.totalorder %s23, 1
      %p125 = por %p123, %p124
      %p126 = scmp.ne.s32.totalorder %s117, %s118
      %p127 = scmp.eq.s32.totalorder %s23, 0
      %p128 = por %p126, %p127
      %p129 = scmp.ne.s32.totalorder %s117, %s118
      %p130 = scmp.eq.s32.totalorder %s24, 1
      %p131 = por %p129, %p130
      %p133 = scmp.ne.s32.totalorder %s118, %s132
      %p134 = scmp.eq.s32.totalorder %s24, 0
      %p135 = por %p133, %p134
      %s136 = ssub.s32 %s18, %s25
      %p137 = scmp.eq.s32.totalorder %s136, 0
      %s139 = sadd.s32 %s138, 1
      %s140 = scalar_select %p137, %s138, %s139
      %p143 = pneg %p137
      %p144 = scmp.eq.s32.totalorder %s18, 1
      %p145 = por %p143, %p144
      %p146 = scmp.ne.s32.totalorder %s138, %s141
      %p147 = scmp.eq.s32.totalorder %s18, 0
      %p148 = por %p146, %p147
      %p149 = scmp.ne.s32.totalorder %s138, %s141
      %p150 = scmp.eq.s32.totalorder %s23, 1
      %p151 = por %p149, %p150
      %p152 = scmp.ne.s32.totalorder %s141, %s142
      %p153 = scmp.eq.s32.totalorder %s23, 0
      %p154 = por %p152, %p153
      %p155 = scmp.ne.s32.totalorder %s141, %s142
      %p156 = scmp.eq.s32.totalorder %s24, 1
      %p157 = por %p155, %p156
      %p159 = scmp.ne.s32.totalorder %s142, %s158
      %p160 = scmp.eq.s32.totalorder %s24, 0
      %p161 = por %p159, %p160
      %p162 = scmp.le.s32.totalorder 1, %s18
      %p163 = scmp.lt.s32.totalorder %s18, 3
      %p164 = pnand %p162, %p163
      %p165 = pneg %p164
      // Predicated region
      $region9: #{tpu_custom_call.1} parent=5 // pred_check
        _
      $region10: #{tpu_custom_call.1} parent=5 // pred_check_branch
        %167 = sbr.rel (%p164) target = $region12
      $region11: #{tpu_custom_call.1} parent=5 // pred_region
        %s168 = ssub.s32 %s18, 1
        // Predicated region
        $region13: #{tpu_custom_call.1} parent=11 // pred_check
          %p169 = pneg %p65
        $region14: #{tpu_custom_call.1} parent=11 // pred_check_branch
          %171 = sbr.rel (%p169) target = $region16
        $region15: #{tpu_custom_call.1} parent=11 // pred_region
          %s173 = ssub.s32 256, 256
          %174 = vsyncadd [#allocation9], %s173
          %s175 = sshll.u32 [#allocation8], 4
          %s176 = int_to_ptr.vmem [resolvable:$true] %s175
          %181 = dma.hbm_to_vmem [thread:$0]  %s1, 256, %s176, [#allocation9], 64, 64, 4
        $region16: #{tpu_custom_call.1} parent=11 // pred_fallthru
          _
        // Predicated region
        $region17: #{tpu_custom_call.1} parent=11 // pred_check
          %p182 = pneg %p86
        $region18: #{tpu_custom_call.1} parent=11 // pred_check_branch
          %184 = sbr.rel (%p182) target = $region20
        $region19: #{tpu_custom_call.1} parent=11 // pred_region
          _
        $region20: #{tpu_custom_call.1} parent=11 // pred_fallthru
          _
        // Predicated region
        $region21: #{tpu_custom_call.1} parent=11 // pred_check
          %p185 = pneg %p107
        $region22: #{tpu_custom_call.1} parent=11 // pred_check_branch
          %187 = sbr.rel (%p185) target = $region24
        $region23: #{tpu_custom_call.1} parent=11 // pred_region
          %s189 = ssub.s32 256, 256
          %190 = vsyncadd [#allocation9], %s189
          %s191 = sshll.u32 [#allocation10], 4
          %s192 = int_to_ptr.vmem [resolvable:$true] %s191
          %197 = dma.hbm_to_vmem [thread:$0]  %s3, 256, %s192, [#allocation9], 64, 64, 4
        $region24: #{tpu_custom_call.1} parent=11 // pred_fallthru
          _
        // Predicated region
        $region25: #{tpu_custom_call.1} parent=11 // pred_check
          %p198 = pneg %p128
        $region26: #{tpu_custom_call.1} parent=11 // pred_check_branch
          %200 = sbr.rel (%p198) target = $region28
        $region27: #{tpu_custom_call.1} parent=11 // pred_region
          _
        $region28: #{tpu_custom_call.1} parent=11 // pred_fallthru
          _
      $region12: #{tpu_custom_call.1} parent=5 // pred_fallthru
        _
      %p201 = scmp.lt.s32.totalorder %s18, 2
      // Predicated region
      $region29: #{tpu_custom_call.1} parent=5 // pred_check
        %p202 = pneg %p201
      $region30: #{tpu_custom_call.1} parent=5 // pred_check_branch
        %204 = sbr.rel (%p202) target = $region32
      $region31: #{tpu_custom_call.1} parent=5 // pred_region
        // Predicated region
        $region33: #{tpu_custom_call.1} parent=31 // pred_check
          %p205 = pneg %p38
        $region34: #{tpu_custom_call.1} parent=31 // pred_check_branch
          %207 = sbr.rel (%p205) target = $region36
        $region35: #{tpu_custom_call.1} parent=31 // pred_region
          %s208 = sand.u32 %s28, 1
          %s209 = scalar_lea.sflag [#allocation6], %s208
          %s210 = sand.u32 %s28, 1
          %s211 = smul.addr %s210, 4
          %s212 = scalar_lea.vmem [#allocation5], %s211
          %s214 = ssub.s32 64, 64
          %215 = vsyncadd %s209, %s214
          %s216 = smul.addr %s18, 64
          %s217 = scalar_lea.hbm %s0, %s216
          %s219 = sshll.u32 %s212, 4
          %s220 = int_to_ptr.vmem [resolvable:$true] %s219
          %222 = dma.hbm_to_vmem [thread:$0]  %s217, 64, %s220, %s209
        $region36: #{tpu_custom_call.1} parent=31 // pred_fallthru
          _
      $region32: #{tpu_custom_call.1} parent=5 // pred_fallthru
        _
      %p223 = scmp.le.s32.totalorder 1, %s18
      %p224 = scmp.lt.s32.totalorder %s18, 3
      %p225 = pnand %p223, %p224
      %p226 = pneg %p225
      // Predicated region
      $region37: #{tpu_custom_call.1} parent=5 // pred_check
        _
      $region38: #{tpu_custom_call.1} parent=5 // pred_check_branch
        %228 = sbr.rel (%p225) target = $region40
      $region39: #{tpu_custom_call.1} parent=5 // pred_region
        %s229 = ssub.s32 %s18, 1
        %s230 = sand.u32 %s31, 1
        %s231 = scalar_lea.sflag [#allocation6], %s230
        %s232 = sand.u32 %s31, 1
        %s233 = smul.addr %s232, 4
        %s234 = scalar_lea.vmem [#allocation5], %s233
        // Predicated region
        $region41: #{tpu_custom_call.1} parent=39 // pred_check
          %p235 = pneg %p44
        $region42: #{tpu_custom_call.1} parent=39 // pred_check_branch
          %237 = sbr.rel (%p235) target = $region44
        $region43: #{tpu_custom_call.1} parent=39 // pred_region
          %238 = dma.done %s231, 64
        $region44: #{tpu_custom_call.1} parent=39 // pred_fallthru
          _
        // Predicated region
        $region45: #{tpu_custom_call.1} parent=39 // pred_check
          %p239 = pneg %p65
        $region46: #{tpu_custom_call.1} parent=39 // pred_check_branch
          %241 = sbr.rel (%p239) target = $region48
        $region47: #{tpu_custom_call.1} parent=39 // pred_region
          %242 = dma.done [#allocation9], 256
        $region48: #{tpu_custom_call.1} parent=39 // pred_fallthru
          _
        // Predicated region
        $region49: #{tpu_custom_call.1} parent=39 // pred_check
          %p243 = pneg %p107
        $region50: #{tpu_custom_call.1} parent=39 // pred_check_branch
          %245 = sbr.rel (%p243) target = $region52
        $region51: #{tpu_custom_call.1} parent=39 // pred_region
          %246 = dma.done [#allocation9], 256
        $region52: #{tpu_custom_call.1} parent=39 // pred_fallthru
          _
        %s247 = sand.u32 %s31, 1
        %s248 = scalar_lea.sflag [#allocation6], %s247
        %s249 = sand.u32 %s31, 1
        %s250 = smul.addr %s249, 4
        %s251 = scalar_lea.vmem [#allocation5], %s250
        %p252 = pneg %p44
        %p253 = pneg %p41
        %p254 = pneg %p65
        %p255 = pneg %p62
        %p256 = pneg %p86
        %p257 = pneg %p83
        %p258 = pneg %p107
        %p259 = pneg %p104
        %p260 = pneg %p128
        %p261 = pneg %p125
        %p262 = pneg %p154
        %p263 = pneg %p151
        %s264 = sand.u32 %s141, 1
        %s265 = scalar_lea.sflag [#allocation7], %s264
        %s266 = sand.u32 %s141, 1
        %s267 = smul.addr %s266, 8
        %s268 = scalar_lea.vmem [#allocation11], %s267
        %v270 = vld [vmem:[%s234] sm:$0xf]
        %v271 = vld [vmem:[#allocation8] sm:$0xf]
        %v272 = vld [vmem:[#allocation8 + $0x4] sm:$0xf]
        %v273 = vld [vmem:[#allocation8 + $0x8] sm:$0xf]
        %v274 = vld [vmem:[#allocation8 + $0xc] sm:$0xf]
        %v275 = vld [vmem:[%s2] sm:$0x1]
        %v277 = vlaneseq
        %v278 = vshrl.u32 %v277, 7
        %v279 = vsub.s32 0, %v278
        %v280 = vrot.slane %v275, %v279
        %v286 = vunpack.c.l.b16 %v271
        %v287 = vunpack.c.l.b16 %v272
        %v288 = vunpack.c.l.b16 %v273
        %v289 = vunpack.c.l.b16 %v274
        %v290 = vpack.c.b16 %v287, %v286
        %v291 = vpack.c.b16 %v289, %v288
        %vm294 = vcmask 261120
        %v296 = vsel %vm294, %v270, 0
        %298 = vmatprep.subr.bf16.mxu0 0
        %299 = vmatpush1.bf16.msra.mxu0 %v290
        %300 = vmatprep.subr.bf16.mxu0 0
        %301 = vmatpush1.bf16.msra.mxu0 %v291
        %302 = vmatprep.subr.bf16.mxu0 0
        %303 = vmatpush1.bf16.msra.mxu0 0
        %304 = vmatprep.subr.bf16.mxu0 0
        %305 = vmatpush1.bf16.msra.mxu0 0
        %306 = vmatprep.subr.bf16.mxu0 0
        %307 = vmatpush1.bf16.msra.mxu0 0
        %308 = vmatprep.subr.bf16.mxu0 0
        %309 = vmatpush1.bf16.msra.mxu0 0
        %310 = vmatprep.subr.bf16.mxu0 0
        %311 = vmatpush1.bf16.msra.mxu0 0
        %312 = vmatprep.subr.bf16.mxu0 0
        %313 = vmatpush1.bf16.msra.mxu0 0
        %314 = vmatprep.subr.bf16.mxu0 0
        %315 = vmatpush1.bf16.msra.mxu0 0
        %316 = vmatprep.subr.bf16.mxu0 0
        %317 = vmatpush1.bf16.msra.mxu0 0
        %318 = vmatprep.subr.bf16.mxu0 0
        %319 = vmatpush1.bf16.msra.mxu0 0
        %320 = vmatprep.subr.bf16.mxu0 0
        %321 = vmatpush1.bf16.msra.mxu0 0
        %322 = vmatprep.subr.bf16.mxu0 0
        %323 = vmatpush1.bf16.msra.mxu0 0
        %324 = vmatprep.subr.bf16.mxu0 0
        %325 = vmatpush1.bf16.msra.mxu0 0
        %326 = vmatprep.subr.bf16.mxu0 0
        %327 = vmatpush1.bf16.msra.mxu0 0
        %328 = vmatprep.subr.bf16.mxu0 0
        %329 = vmatpush1.bf16.msra.mxu0 0
        %330 = vmatprep.mubr.bf16.mxu0 0
        %331 = vmatmul.mubr.bf16.gmra.mrb[0].mxu0 %v296
        %v332 = vpop.f32.mrb[0].mxu0
        %v333 = vadd.f32 %v280, %v332
        %v334 = vpop.f32.mrb[0].mxu0
        %v335 = vpop.f32.mrb[0].mxu0
        %v336 = vpop.f32.mrb[0].mxu0
        %337 = vdwg.mxu0
        %v338 = vpack.c.bf16 %v333, %v333
        %vm339 = vcmask 60416
        %340 = vst.msk [vmem:[#allocation2] sm:$0xf] %vm339, %v338
        %v342 = vunpack.c.l.b16 %v338
        %v343 = vpack.c.b16 %v342, %v342
        %344 = vrot.lane.b32.xlu0 %v343, 120
        %v345 = vpop.permute.xlu0 %344
        %s347 = scalar_lea.vmem [#allocation2], 4
        %348 = vst.msk [vmem:[%s347] sm:$0xf] %vm339, %v345
        %349 = vrot.lane.b32.xlu0 %v343, 112
        %v350 = vpop.permute.xlu0 %349
        %s352 = scalar_lea.vmem [#allocation2], 8
        %353 = vst.msk [vmem:[%s352] sm:$0xf] %vm339, %v350
        %354 = vrot.lane.b32.xlu0 %v343, 104
        %v355 = vpop.permute.xlu0 %354
        %s357 = scalar_lea.vmem [#allocation2], 12
        %358 = vst.msk [vmem:[%s357] sm:$0xf] %vm339, %v355
        %359 = vrot.lane.b32.xlu0 %v343, 96
        %v360 = vpop.permute.xlu0 %359
        %s362 = scalar_lea.vmem [#allocation2], 16
        %363 = vst.msk [vmem:[%s362] sm:$0xf] %vm339, %v360
        %364 = vrot.lane.b32.xlu0 %v343, 88
        %v365 = vpop.permute.xlu0 %364
        %s367 = scalar_lea.vmem [#allocation2], 20
        %368 = vst.msk [vmem:[%s367] sm:$0xf] %vm339, %v365
        %369 = vrot.lane.b32.xlu0 %v343, 80
        %v370 = vpop.permute.xlu0 %369
        %s372 = scalar_lea.vmem [#allocation2], 24
        %373 = vst.msk [vmem:[%s372] sm:$0xf] %vm339, %v370
        %374 = vrot.lane.b32.xlu0 %v343, 72
        %v375 = vpop.permute.xlu0 %374
        %s377 = scalar_lea.vmem [#allocation2], 28
        %378 = vst.msk [vmem:[%s377] sm:$0xf] %vm339, %v375
        %379 = vrot.lane.b32.xlu0 %v343, 64
        %v380 = vpop.permute.xlu0 %379
        %s382 = scalar_lea.vmem [#allocation2], 32
        %383 = vst.msk [vmem:[%s382] sm:$0xf] %vm339, %v380
        %384 = vrot.lane.b32.xlu0 %v343, 56
        %v385 = vpop.permute.xlu0 %384
        %s387 = scalar_lea.vmem [#allocation2], 36
        %388 = vst.msk [vmem:[%s387] sm:$0xf] %vm339, %v385
        %389 = vrot.lane.b32.xlu0 %v343, 48
        %v390 = vpop.permute.xlu0 %389
        %s392 = scalar_lea.vmem [#allocation2], 40
        %393 = vst.msk [vmem:[%s392] sm:$0xf] %vm339, %v390
        %394 = vrot.lane.b32.xlu0 %v343, 40
        %v395 = vpop.permute.xlu0 %394
        %s397 = scalar_lea.vmem [#allocation2], 44
        %398 = vst.msk [vmem:[%s397] sm:$0xf] %vm339, %v395
        %v399 = vlaneseq
        %v400 = vshrl.u32 %v399, 7
        %v401 = vlaneseq
        %v402 = vand.u32 %v401, 127
        %vm403 = vcmp.lt.s32.totalorder %v402, %v400
        %v404 = vsel %vm403, -1e+30, 0.0
        loop: start=0, step=1, limit=4
        $region53: #{tpu_custom_call.1} parent=39 // loop_pre_header
          _
        $region54: #{tpu_custom_call.1} parent=39 // loop_header
          %s406 = sphi 0, %s410
          %p407 = scmp.ge.s32.totalorder %s406, 4
        $region55: #{tpu_custom_call.1} parent=39 // loop_header_branch
          %409 = sbr.rel (%p407) target = $region59
        $region56: #{tpu_custom_call.1} parent=39 // loop_body
          %s411 = smul.addr %s406, 4
          %s412 = scalar_lea.vmem [#allocation2], %s411
          %v413 = vld [vmem:[%s412] sm:$0xf]
          %s414 = sadd.s32 %s406, 4
          %s415 = smul.addr %s414, 4
          %s416 = scalar_lea.vmem [#allocation2], %s415
          %v417 = vld [vmem:[%s416] sm:$0xf]
          %s418 = sadd.s32 %s406, 8
          %s419 = smul.addr %s418, 4
          %s420 = scalar_lea.vmem [#allocation2], %s419
          %v421 = vld [vmem:[%s420] sm:$0xf]
          %vm422 = vcmask 64512
          %v424 = vsel %vm422, %v413, 0
          %v427 = vsel %vm422, %v417, 0
          %429 = vmatprep.subr.bf16.mxu0 0
          %430 = vmatpush1.bf16.xpose.msra.mxu0 %v427
          %431 = vmatprep.subr.bf16.mxu0 0
          %432 = vmatpush1.bf16.xpose.msra.mxu0 0
          %433 = vmatprep.subr.bf16.mxu0 0
          %434 = vmatpush1.bf16.xpose.msra.mxu0 0
          %435 = vmatprep.subr.bf16.mxu0 0
          %436 = vmatpush1.bf16.xpose.msra.mxu0 0
          %437 = vmatprep.subr.bf16.mxu0 0
          %438 = vmatpush1.bf16.xpose.msra.mxu0 0
          %439 = vmatprep.subr.bf16.mxu0 0
          %440 = vmatpush1.bf16.xpose.msra.mxu0 0
          %441 = vmatprep.subr.bf16.mxu0 0
          %442 = vmatpush1.bf16.xpose.msra.mxu0 0
          %443 = vmatprep.subr.bf16.mxu0 0
          %444 = vmatpush1.bf16.xpose.msra.mxu0 0
          %445 = vmatprep.subr.bf16.mxu0 0
          %446 = vmatpush1.bf16.xpose.msra.mxu0 0
          %447 = vmatprep.subr.bf16.mxu0 0
          %448 = vmatpush1.bf16.xpose.msra.mxu0 0
          %449 = vmatprep.subr.bf16.mxu0 0
          %450 = vmatpush1.bf16.xpose.msra.mxu0 0
          %451 = vmatprep.subr.bf16.mxu0 0
          %452 = vmatpush1.bf16.xpose.msra.mxu0 0
          %453 = vmatprep.subr.bf16.mxu0 0
          %454 = vmatpush1.bf16.xpose.msra.mxu0 0
          %455 = vmatprep.subr.bf16.mxu0 0
          %456 = vmatpush1.bf16.xpose.msra.mxu0 0
          %457 = vmatprep.subr.bf16.mxu0 0
          %458 = vmatpush1.bf16.xpose.msra.mxu0 0
          %459 = vmatprep.subr.bf16.mxu0 0
          %460 = vmatpush1.bf16.xpose.msra.mxu0 0
          %461 = vmatprep.mubr.bf16.mxu0 0
          %462 = vmatmul.mubr.bf16.gmra.mrb[0].mxu0 %v424
          %v463 = vpop.f32.mrb[0].mxu0
          %v464 = vadd.f32 %v404, %v463
          %v465 = vpop.f32.mrb[0].mxu0
          %v466 = vpop.f32.mrb[0].mxu0
          %v467 = vpop.f32.mrb[0].mxu0
          %468 = vdwg.mxu0
          %v469 = vsel %vm422, %v464, -inf
          %470 = vmax.xlane.f32.xlu0 %v469
          %v471 = vpop.xlane.xlu0 %470
          %v472 = vsub.f32 %v464, %v471
          %v473 = vmul.f32 %v472, 1.442695
          %v474 = vpow.pop %v473
          %v475 = vsel %vm422, %v474, 0.0
          %476 = vadd.xlane.f32.xlu0 %v475
          %v477 = vpop.xlane.xlu0 %476
          %v478 = vpack.c.bf16 %v474, %v474
          %v480 = vsel %vm422, %v478, 0
          %vm482 = vcmask 1043456
          %v484 = vsel %vm482, %v421, 0
          %486 = vmatprep.subr.bf16.mxu0 0
          %487 = vmatpush1.bf16.msra.mxu0 %v484
          %488 = vmatprep.subr.bf16.mxu0 0
          %489 = vmatpush1.bf16.msra.mxu0 0
          %490 = vmatprep.subr.bf16.mxu0 0
          %491 = vmatpush1.bf16.msra.mxu0 0
          %492 = vmatprep.subr.bf16.mxu0 0
          %493 = vmatpush1.bf16.msra.mxu0 0
          %494 = vmatprep.subr.bf16.mxu0 0
          %495 = vmatpush1.bf16.msra.mxu0 0
          %496 = vmatprep.subr.bf16.mxu0 0
          %497 = vmatpush1.bf16.msra.mxu0 0
          %498 = vmatprep.subr.bf16.mxu0 0
          %499 = vmatpush1.bf16.msra.mxu0 0
          %500 = vmatprep.subr.bf16.mxu0 0
          %501 = vmatpush1.bf16.msra.mxu0 0
          %502 = vmatprep.subr.bf16.mxu0 0
          %503 = vmatpush1.bf16.msra.mxu0 0
          %504 = vmatprep.subr.bf16.mxu0 0
          %505 = vmatpush1.bf16.msra.mxu0 0
          %506 = vmatprep.subr.bf16.mxu0 0
          %507 = vmatpush1.bf16.msra.mxu0 0
          %508 = vmatprep.subr.bf16.mxu0 0
          %509 = vmatpush1.bf16.msra.mxu0 0
          %510 = vmatprep.subr.bf16.mxu0 0
          %511 = vmatpush1.bf16.msra.mxu0 0
          %512 = vmatprep.subr.bf16.mxu0 0
          %513 = vmatpush1.bf16.msra.mxu0 0
          %514 = vmatprep.subr.bf16.mxu0 0
          %515 = vmatpush1.bf16.msra.mxu0 0
          %516 = vmatprep.subr.bf16.mxu0 0
          %517 = vmatpush1.bf16.msra.mxu0 0
          %518 = vmatprep.mubr.bf16.mxu0 0
          %519 = vmatmul.mubr.bf16.gmra.mrb[0].mxu0 %v480
          %v520 = vpop.f32.mrb[0].mxu0
          %v521 = vadd.f32 0.0, %v520
          %v522 = vpop.f32.mrb[0].mxu0
          %v523 = vpop.f32.mrb[0].mxu0
          %v524 = vpop.f32.mrb[0].mxu0
          %525 = vdwg.mxu0
          %v526 = vrcp.pop %v477
          %v527 = vmul.f32 %v521, %v526
          %v528 = vpack.c.bf16 %v527, %v527
          %s529 = smul.addr %s406, 4
          %s530 = scalar_lea.vmem [#allocation3], %s529
          %531 = vst.msk [vmem:[%s530] sm:$0xf] %vm339, %v528
        $region57: #{tpu_custom_call.1} parent=39 // loop_footer
          %s410 = sadd.s32 1, %s406
        $region58: #{tpu_custom_call.1} parent=39 // loop_footer_branch
          %405 = sbr.rel target = $region54
        $region59: #{tpu_custom_call.1} parent=39 // loop_exit
          _
        %v532 = vld [vmem:[#allocation3] sm:$0xf]
        %533 = vst.msk [vmem:[#allocation4] sm:$0xf] %vm339, %v532
        %s534 = scalar_lea.vmem [#allocation3], 4
        %v535 = vld [vmem:[%s534] sm:$0xf]
        %537 = vrot.lane.b32.xlu0 %v535, 8
        %v538 = vpop.permute.xlu0 %537
        %vm540 = vcmask 126016
        %541 = vst.msk [vmem:[#allocation4] sm:$0xf] %vm540, %v538
        %s542 = scalar_lea.vmem [#allocation3], 8
        %v543 = vld [vmem:[%s542] sm:$0xf]
        %545 = vrot.lane.b32.xlu0 %v543, 16
        %v546 = vpop.permute.xlu0 %545
        %vm548 = vcmask 191616
        %549 = vst.msk [vmem:[#allocation4] sm:$0xf] %vm548, %v546
        %s550 = scalar_lea.vmem [#allocation3], 12
        %v551 = vld [vmem:[%s550] sm:$0xf]
        %553 = vrot.lane.b32.xlu0 %v551, 24
        %v554 = vpop.permute.xlu0 %553
        %vm556 = vcmask 257216
        %557 = vst.msk [vmem:[#allocation4] sm:$0xf] %vm556, %v554
        %v558 = vld [vmem:[#allocation4] sm:$0xf]
        %v559 = vld [vmem:[#allocation10] sm:$0xf]
        %v560 = vld [vmem:[#allocation10 + $0x4] sm:$0xf]
        %v561 = vld [vmem:[#allocation10 + $0x8] sm:$0xf]
        %v562 = vld [vmem:[#allocation10 + $0xc] sm:$0xf]
        %v563 = vld [vmem:[%s4] sm:$0x1]
        %v565 = vlaneseq
        %v566 = vshrl.u32 %v565, 7
        %v567 = vsub.s32 0, %v566
        %v568 = vrot.slane %v563, %v567
        %v574 = vunpack.c.l.b16 %v559
        %v575 = vunpack.c.l.b16 %v560
        %v576 = vunpack.c.l.b16 %v561
        %v577 = vunpack.c.l.b16 %v562
        %v578 = vpack.c.b16 %v575, %v574
        %v579 = vpack.c.b16 %v577, %v576
        %v583 = vsel %vm294, %v558, 0
        %585 = vmatprep.subr.bf16.mxu0 0
        %586 = vmatpush1.bf16.msra.mxu0 %v578
        %587 = vmatprep.subr.bf16.mxu0 0
        %588 = vmatpush1.bf16.msra.mxu0 %v579
        %589 = vmatprep.subr.bf16.mxu0 0
        %590 = vmatpush1.bf16.msra.mxu0 0
        %591 = vmatprep.subr.bf16.mxu0 0
        %592 = vmatpush1.bf16.msra.mxu0 0
        %593 = vmatprep.subr.bf16.mxu0 0
        %594 = vmatpush1.bf16.msra.mxu0 0
        %595 = vmatprep.subr.bf16.mxu0 0
        %596 = vmatpush1.bf16.msra.mxu0 0
        %597 = vmatprep.subr.bf16.mxu0 0
        %598 = vmatpush1.bf16.msra.mxu0 0
        %599 = vmatprep.subr.bf16.mxu0 0
        %600 = vmatpush1.bf16.msra.mxu0 0
        %601 = vmatprep.subr.bf16.mxu0 0
        %602 = vmatpush1.bf16.msra.mxu0 0
        %603 = vmatprep.subr.bf16.mxu0 0
        %604 = vmatpush1.bf16.msra.mxu0 0
        %605 = vmatprep.subr.bf16.mxu0 0
        %606 = vmatpush1.bf16.msra.mxu0 0
        %607 = vmatprep.subr.bf16.mxu0 0
        %608 = vmatpush1.bf16.msra.mxu0 0
        %609 = vmatprep.subr.bf16.mxu0 0
        %610 = vmatpush1.bf16.msra.mxu0 0
        %611 = vmatprep.subr.bf16.mxu0 0
        %612 = vmatpush1.bf16.msra.mxu0 0
        %613 = vmatprep.subr.bf16.mxu0 0
        %614 = vmatpush1.bf16.msra.mxu0 0
        %615 = vmatprep.subr.bf16.mxu0 0
        %616 = vmatpush1.bf16.msra.mxu0 0
        %617 = vmatprep.mubr.bf16.mxu0 0
        %618 = vmatmul.mubr.bf16.gmra.mrb[0].mxu0 %v583
        %v619 = vpop.f32.mrb[0].mxu0
        %v620 = vadd.f32 %v568, %v619
        %v621 = vpop.f32.mrb[0].mxu0
        %v622 = vpop.f32.mrb[0].mxu0
        %v623 = vpop.f32.mrb[0].mxu0
        %624 = vdwg.mxu0
        %625 = vst.msk [vmem:[%s268] sm:$0xff] %vm294, %v620
        %s626 = sand.u32 %s141, 1
        %s627 = scalar_lea.sflag [#allocation7], %s626
        %s628 = sand.u32 %s141, 1
        %s629 = smul.addr %s628, 8
        %s630 = scalar_lea.vmem [#allocation11], %s629
        // Predicated region
        $region60: #{tpu_custom_call.1} parent=39 // pred_check
          %p631 = pneg %p151
        $region61: #{tpu_custom_call.1} parent=39 // pred_check_branch
          %633 = sbr.rel (%p631) target = $region63
        $region62: #{tpu_custom_call.1} parent=39 // pred_region
          %s635 = ssub.s32 128, 128
          %636 = vsyncadd %s627, %s635
          %s637 = smul.addr %s23, 128
          %s638 = scalar_lea.hbm %s5, %s637
          %s640 = sshll.u32 %s630, 4
          %s641 = int_to_ptr.vmem [resolvable:$true] %s640
          %643 = dma.vmem_to_hbm [thread:$0]  %s641, 128, %s638, %s627
        $region63: #{tpu_custom_call.1} parent=39 // pred_fallthru
          _
      $region40: #{tpu_custom_call.1} parent=5 // pred_fallthru
        _
      %p644 = scmp.le.s32.totalorder 2, %s18
      // Predicated region
      $region64: #{tpu_custom_call.1} parent=5 // pred_check
        %p645 = pneg %p644
      $region65: #{tpu_custom_call.1} parent=5 // pred_check_branch
        %647 = sbr.rel (%p645) target = $region67
      $region66: #{tpu_custom_call.1} parent=5 // pred_region
        %s648 = ssub.s32 %s18, 2
        // Predicated region
        $region68: #{tpu_custom_call.1} parent=66 // pred_check
          %p649 = pneg %p157
        $region69: #{tpu_custom_call.1} parent=66 // pred_check_branch
          %651 = sbr.rel (%p649) target = $region71
        $region70: #{tpu_custom_call.1} parent=66 // pred_region
          %s652 = sand.u32 %s142, 1
          %s653 = scalar_lea.sflag [#allocation7], %s652
          %s654 = sand.u32 %s142, 1
          %s655 = smul.addr %s654, 8
          %s656 = scalar_lea.vmem [#allocation11], %s655
          %657 = dma.done %s653, 128
        $region71: #{tpu_custom_call.1} parent=66 // pred_fallthru
          _
      $region67: #{tpu_custom_call.1} parent=5 // pred_fallthru
        _
    $region6: #{tpu_custom_call.1} parent=1 // loop_footer
      %s22 = sadd.s32 1, %s18
    $region7: #{tpu_custom_call.1} parent=1 // loop_footer_branch
      %17 = sbr.rel target = $region3
    $region8: #{tpu_custom_call.1} parent=1 // loop_exit
      _
    %658 = vsyncpa [#allocation6], 1
    %s659 = scalar_lea.sflag [#allocation6], 1
    %660 = vsyncpa %s659, 1
    %661 = vsyncpa [#allocation9], 1
    %662 = vsyncpa [#allocation7], 1
    %s663 = scalar_lea.sflag [#allocation7], 1
    %664 = vsyncpa %s663, 1

// kernel: tpu_custom_call.1
$region0: #{tpu_custom_call.1}
  #allocation0 [shape = 'u32[]', space=smem, size = 0x4, offset = 0x4, fixed_abs, tag = 'smem constant byte address 0x4 - core index']
  #allocation1 [shape = 'u32[144,128]{1,0:T(1,128)}', space=vmem, size = 0x12000, scoped, tag = 'internal scratch']
  #allocation2 [shape = 'bf16[12,8,8]{2,1,0:T(8,128)(2,1)}', space=vmem, size = 0x6000, scoped, tag = 'scratch operand']
  #allocation3 [shape = 'bf16[4,8,8]{2,1,0:T(8,128)(2,1)}', space=vmem, size = 0x2000, scoped, tag = 'scratch operand']
  #allocation4 [shape = 'bf16[8,32]{1,0:T(8,128)(2,1)}', space=vmem, size = 0x800, scoped, tag = 'scratch operand']
  %s0 = inlined_call_operand.hbm [shape: bf16[2,8,32], index: 0, kind: input, shape index: {}]
  %s1 = inlined_call_operand.hbm [shape: bf16[32,96], index: 1, kind: input, shape index: {}]
  %s2 = inlined_call_operand.vmem [shape: f32[1,96], index: 2, kind: input, shape index: {}]
  %s3 = inlined_call_operand.hbm [shape: bf16[32,32], index: 3, kind: input, shape index: {}]
  %s4 = inlined_call_operand.vmem [shape: f32[1,32], index: 4, kind: input, shape index: {}]
  %s5 = inlined_call_operand.hbm [shape: f32[2,8,32], index: 5, kind: output, shape index: {}]
  %s6 = sld [smem:[#allocation0]]
  $region72: #{tpu_custom_call.1} parent=0
    _
  %s8 = ssub.s32 1, %s6
  %s9 = scalar_select 0, %s8, %s6
  $region1: #{tpu_custom_call.1} parent=0
    #allocation5 [shape = 'u8[4096]{0}', space=vmem, size = 0x1000, scoped, tag = 'input window, operand 0']
    #allocation6 [shape = 's32[2]{0}', space=sflag, size = 0x8, scoped, tag = 'scoped memory for tpu_custom_call.1']
    #allocation7 [shape = 's32[2]{0}', space=sflag, size = 0x8, scoped, tag = 'scoped memory for tpu_custom_call.1']
    #allocation8 [shape = 'u8[8192]{0}', space=vmem, size = 0x2000, scoped, tag = 'input window, operand 1, single buffered']
    #allocation9 [shape = 's32[1]{0}', space=sflag, size = 0x4, scoped, tag = 'scoped memory for tpu_custom_call.1']
    #allocation10 [shape = 'u8[8192]{0}', space=vmem, size = 0x2000, scoped, tag = 'input window, operand 3, single buffered']
    #allocation11 [shape = 'u8[8192]{0}', space=vmem, size = 0x2000, scoped, tag = 'output window, operand 0']
    %10 = vsyncpa [#allocation6], 0
    %s11 = scalar_lea.sflag [#allocation6], 1
    %12 = vsyncpa %s11, 0
    %13 = vsyncpa [#allocation9], 0
    %14 = vsyncpa [#allocation7], 0
    %s15 = scalar_lea.sflag [#allocation7], 1
    %16 = vsyncpa %s15, 0
    loop: start=0, step=1, limit=4
    $region2: #{tpu_custom_call.1} parent=1 // loop_pre_header
      _
    $region3: #{tpu_custom_call.1} parent=1 // loop_header
      %s18 = sphi 0, %s22
      %p19 = scmp.ge.s32.totalorder %s18, 4
      %s28 = sphi 0, %s30
      %s31 = sphi 0, %s28
      %s32 = sphi 0, %s31
      %s48 = sphi 0, %s32
      %s52 = sphi 0, %s52
      %s54 = sphi 0, %s52
      %s55 = sphi 0, %s54
      %s69 = sphi 0, %s55
      %s73 = sphi 0, %s73
      %s75 = sphi 0, %s73
      %s76 = sphi 0, %s75
      %s90 = sphi 0, %s76
      %s94 = sphi 0, %s94
      %s96 = sphi 0, %s94
      %s97 = sphi 0, %s96
      %s111 = sphi 0, %s97
      %s115 = sphi 0, %s115
      %s117 = sphi 0, %s115
      %s118 = sphi 0, %s117
      %s132 = sphi 0, %s118
      %s138 = sphi 0, %s140
      %s141 = sphi 0, %s138
      %s142 = sphi 0, %s141
      %s158 = sphi 0, %s142
    $region4: #{tpu_custom_call.1} parent=1 // loop_header_branch
      %21 = sbr.rel (%p19) target = $region8
    $region5: #{tpu_custom_call.1} parent=1 // loop_body
      %s23 = ssub.s32 %s18, 1
      %s24 = ssub.s32 %s18, 2
      %s25 = sadd.s32 %s18, 1
      %s26 = ssub.s32 %s18, %s25
      %p27 = scmp.eq.s32.totalorder %s26, 0
      %s29 = sadd.s32 %s28, 1
      %s30 = scalar_select %p27, %s28, %s29
      %p33 = pneg %p27
      %p34 = scmp.eq.s32.totalorder %s18, 1
      %p35 = por %p33, %p34
      %p36 = scmp.ne.s32.totalorder %s28, %s31
      %p37 = scmp.eq.s32.totalorder %s18, 0
      %p38 = por %p36, %p37
      %p39 = scmp.ne.s32.totalorder %s28, %s31
      %p40 = scmp.eq.s32.totalorder %s23, 1
      %p41 = por %p39, %p40
      %p42 = scmp.ne.s32.totalorder %s31, %s32
      %p43 = scmp.eq.s32.totalorder %s23, 0
      %p44 = por %p42, %p43
      %p45 = scmp.ne.s32.totalorder %s31, %s32
      %p46 = scmp.eq.s32.totalorder %s24, 1
      %p47 = por %p45, %p46
      %p49 = scmp.ne.s32.totalorder %s32, %s48
      %p50 = scmp.eq.s32.totalorder %s24, 0
      %p51 = por %p49, %p50
      %s53 = sadd.s32 %s52, 1
      %p56 = scmp.eq.s32.totalorder %s18, 1
      %p57 = scmp.ne.s32.totalorder %s52, %s54
      %p58 = scmp.eq.s32.totalorder %s18, 0
      %p59 = por %p57, %p58
      %p60 = scmp.ne.s32.totalorder %s52, %s54
      %p61 = scmp.eq.s32.totalorder %s23, 1
      %p62 = por %p60, %p61
      %p63 = scmp.ne.s32.totalorder %s54, %s55
      %p64 = scmp.eq.s32.totalorder %s23, 0
      %p65 = por %p63, %p64
      %p66 = scmp.ne.s32.totalorder %s54, %s55
      %p67 = scmp.eq.s32.totalorder %s24, 1
      %p68 = por %p66, %p67
      %p70 = scmp.ne.s32.totalorder %s55, %s69
      %p71 = scmp.eq.s32.totalorder %s24, 0
      %p72 = por %p70, %p71
      %s74 = sadd.s32 %s73, 1
      %p77 = scmp.eq.s32.totalorder %s18, 1
      %p78 = scmp.ne.s32.totalorder %s73, %s75
      %p79 = scmp.eq.s32.totalorder %s18, 0
      %p80 = por %p78, %p79
      %p81 = scmp.ne.s32.totalorder %s73, %s75
      %p82 = scmp.eq.s32.totalorder %s23, 1
      %p83 = por %p81, %p82
      %p84 = scmp.ne.s32.totalorder %s75, %s76
      %p85 = scmp.eq.s32.totalorder %s23, 0
      %p86 = por %p84, %p85
      %p87 = scmp.ne.s32.totalorder %s75, %s76
      %p88 = scmp.eq.s32.totalorder %s24, 1
      %p89 = por %p87, %p88
      %p91 = scmp.ne.s32.totalorder %s76, %s90
      %p92 = scmp.eq.s32.totalorder %s24, 0
      %p93 = por %p91, %p92
      %s95 = sadd.s32 %s94, 1
      %p98 = scmp.eq.s32.totalorder %s18, 1
      %p99 = scmp.ne.s32.totalorder %s94, %s96
      %p100 = scmp.eq.s32.totalorder %s18, 0
      %p101 = por %p99, %p100
      %p102 = scmp.ne.s32.totalorder %s94, %s96
      %p103 = scmp.eq.s32.totalorder %s23, 1
      %p104 = por %p102, %p103
      %p105 = scmp.ne.s32.totalorder %s96, %s97
      %p106 = scmp.eq.s32.totalorder %s23, 0
      %p107 = por %p105, %p106
      %p108 = scmp.ne.s32.totalorder %s96, %s97
      %p109 = scmp.eq.s32.totalorder %s24, 1
      %p110 = por %p108, %p109
      %p112 = scmp.ne.s32.totalorder %s97, %s111
      %p113 = scmp.eq.s32.totalorder %s24, 0
      %p114 = por %p112, %p113
      %s116 = sadd.s32 %s115, 1
      %p119 = scmp.eq.s32.totalorder %s18, 1
      %p120 = scmp.ne.s32.totalorder %s115, %s117
      %p121 = scmp.eq.s32.totalorder %s18, 0
      %p122 = por %p120, %p121
      %p123 = scmp.ne.s32.totalorder %s115, %s117
      %p124 = scmp.eq.s32.totalorder %s23, 1
      %p125 = por %p123, %p124
      %p126 = scmp.ne.s32.totalorder %s117, %s118
      %p127 = scmp.eq.s32.totalorder %s23, 0
      %p128 = por %p126, %p127
      %p129 = scmp.ne.s32.totalorder %s117, %s118
      %p130 = scmp.eq.s32.totalorder %s24, 1
      %p131 = por %p129, %p130
      %p133 = scmp.ne.s32.totalorder %s118, %s132
      %p134 = scmp.eq.s32.totalorder %s24, 0
      %p135 = por %p133, %p134
      %s136 = ssub.s32 %s18, %s25
      %p137 = scmp.eq.s32.totalorder %s136, 0
      %s139 = sadd.s32 %s138, 1
      %s140 = scalar_select %p137, %s138, %s139
      %p143 = pneg %p137
      %p144 = scmp.eq.s32.totalorder %s18, 1
      %p145 = por %p143, %p144
      %p146 = scmp.ne.s32.totalorder %s138, %s141
      %p147 = scmp.eq.s32.totalorder %s18, 0
      %p148 = por %p146, %p147
      %p149 = scmp.ne.s32.totalorder %s138, %s141
      %p150 = scmp.eq.s32.totalorder %s23, 1
      %p151 = por %p149, %p150
      %p152 = scmp.ne.s32.totalorder %s141, %s142
      %p153 = scmp.eq.s32.totalorder %s23, 0
      %p154 = por %p152, %p153
      %p155 = scmp.ne.s32.totalorder %s141, %s142
      %p156 = scmp.eq.s32.totalorder %s24, 1
      %p157 = por %p155, %p156
      %p159 = scmp.ne.s32.totalorder %s142, %s158
      %p160 = scmp.eq.s32.totalorder %s24, 0
      %p161 = por %p159, %p160
      %p162 = scmp.le.s32.totalorder 1, %s18
      %p163 = scmp.lt.s32.totalorder %s18, 3
      %p164 = pnand %p162, %p163
      %p165 = pneg %p164
      // Predicated region
      $region9: #{tpu_custom_call.1} parent=5 // pred_check
        _
      $region10: #{tpu_custom_call.1} parent=5 // pred_check_branch
        %167 = sbr.rel (%p164) target = $region12
      $region11: #{tpu_custom_call.1} parent=5 // pred_region
        %s168 = ssub.s32 %s18, 1
        // Predicated region
        $region13: #{tpu_custom_call.1} parent=11 // pred_check
          %p169 = pneg %p65
        $region14: #{tpu_custom_call.1} parent=11 // pred_check_branch
          %171 = sbr.rel (%p169) target = $region16
        $region15: #{tpu_custom_call.1} parent=11 // pred_region
          %s173 = ssub.s32 256, 256
          %174 = vsyncadd [#allocation9], %s173
          %s175 = sshll.u32 [#allocation8], 4
          %s176 = int_to_ptr.vmem [resolvable:$true] %s175
          %181 = dma.hbm_to_vmem [thread:$0]  %s1, 256, %s176, [#allocation9], 64, 64, 4
        $region16: #{tpu_custom_call.1} parent=11 // pred_fallthru
          _
        // Predicated region
        $region17: #{tpu_custom_call.1} parent=11 // pred_check
          %p182 = pneg %p86
        $region18: #{tpu_custom_call.1} parent=11 // pred_check_branch
          %184 = sbr.rel (%p182) target = $region20
        $region19: #{tpu_custom_call.1} parent=11 // pred_region
          _
        $region20: #{tpu_custom_call.1} parent=11 // pred_fallthru
          _
        // Predicated region
        $region21: #{tpu_custom_call.1} parent=11 // pred_check
          %p185 = pneg %p107
        $region22: #{tpu_custom_call.1} parent=11 // pred_check_branch
          %187 = sbr.rel (%p185) target = $region24
        $region23: #{tpu_custom_call.1} parent=11 // pred_region
          %s189 = ssub.s32 256, 256
          %190 = vsyncadd [#allocation9], %s189
          %s191 = sshll.u32 [#allocation10], 4
          %s192 = int_to_ptr.vmem [resolvable:$true] %s191
          %197 = dma.hbm_to_vmem [thread:$0]  %s3, 256, %s192, [#allocation9], 64, 64, 4
        $region24: #{tpu_custom_call.1} parent=11 // pred_fallthru
          _
        // Predicated region
        $region25: #{tpu_custom_call.1} parent=11 // pred_check
          %p198 = pneg %p128
        $region26: #{tpu_custom_call.1} parent=11 // pred_check_branch
          %200 = sbr.rel (%p198) target = $region28
        $region27: #{tpu_custom_call.1} parent=11 // pred_region
          _
        $region28: #{tpu_custom_call.1} parent=11 // pred_fallthru
          _
      $region12: #{tpu_custom_call.1} parent=5 // pred_fallthru
        _
      %p201 = scmp.lt.s32.totalorder %s18, 2
      // Predicated region
      $region29: #{tpu_custom_call.1} parent=5 // pred_check
        %p202 = pneg %p201
      $region30: #{tpu_custom_call.1} parent=5 // pred_check_branch
        %204 = sbr.rel (%p202) target = $region32
      $region31: #{tpu_custom_call.1} parent=5 // pred_region
        // Predicated region
        $region33: #{tpu_custom_call.1} parent=31 // pred_check
          %p205 = pneg %p38
        $region34: #{tpu_custom_call.1} parent=31 // pred_check_branch
          %207 = sbr.rel (%p205) target = $region36
        $region35: #{tpu_custom_call.1} parent=31 // pred_region
          %s208 = sand.u32 %s28, 1
          %s209 = scalar_lea.sflag [#allocation6], %s208
          %s210 = sand.u32 %s28, 1
          %s211 = smul.addr %s210, 4
          %s212 = scalar_lea.vmem [#allocation5], %s211
          %s214 = ssub.s32 64, 64
          %215 = vsyncadd %s209, %s214
          %s216 = smul.addr %s18, 64
          %s217 = scalar_lea.hbm %s0, %s216
          %s219 = sshll.u32 %s212, 4
          %s220 = int_to_ptr.vmem [resolvable:$true] %s219
          %222 = dma.hbm_to_vmem [thread:$0]  %s217, 64, %s220, %s209
        $region36: #{tpu_custom_call.1} parent=31 // pred_fallthru
          _
      $region32: #{tpu_custom_call.1} parent=5 // pred_fallthru
        _
      %p223 = scmp.le.s32.totalorder 1, %s18
      %p224 = scmp.lt.s32.totalorder %s18, 3
      %p225 = pnand %p223, %p224
      %p226 = pneg %p225
      // Predicated region
      $region37: #{tpu_custom_call.1} parent=5 // pred_check
        _
      $region38: #{tpu_custom_call.1} parent=5 // pred_check_branch
        %228 = sbr.rel (%p225) target = $region40
      $region39: #{tpu_custom_call.1} parent=5 // pred_region
        %s229 = ssub.s32 %s18, 1
        %s230 = sand.u32 %s31, 1
        %s231 = scalar_lea.sflag [#allocation6], %s230
        %s232 = sand.u32 %s31, 1
        %s233 = smul.addr %s232, 4
        %s234 = scalar_lea.vmem [#allocation5], %s233
        // Predicated region
        $region41: #{tpu_custom_call.1} parent=39 // pred_check
          %p235 = pneg %p44
        $region42: #{tpu_custom_call.1} parent=39 // pred_check_branch
          %237 = sbr.rel (%p235) target = $region44
        $region43: #{tpu_custom_call.1} parent=39 // pred_region
          %238 = dma.done %s231, 64
        $region44: #{tpu_custom_call.1} parent=39 // pred_fallthru
          _
        // Predicated region
        $region45: #{tpu_custom_call.1} parent=39 // pred_check
          %p239 = pneg %p65
        $region46: #{tpu_custom_call.1} parent=39 // pred_check_branch
          %241 = sbr.rel (%p239) target = $region48
        $region47: #{tpu_custom_call.1} parent=39 // pred_region
          %242 = dma.done [#allocation9], 256
        $region48: #{tpu_custom_call.1} parent=39 // pred_fallthru
          _
        // Predicated region
        $region49: #{tpu_custom_call.1} parent=39 // pred_check
          %p243 = pneg %p107
        $region50: #{tpu_custom_call.1} parent=39 // pred_check_branch
          %245 = sbr.rel (%p243) target = $region52
        $region51: #{tpu_custom_call.1} parent=39 // pred_region
          %246 = dma.done [#allocation9], 256
        $region52: #{tpu_custom_call.1} parent=39 // pred_fallthru
          _
        %s247 = sand.u32 %s31, 1
        %s248 = scalar_lea.sflag [#allocation6], %s247
        %s249 = sand.u32 %s31, 1
        %s250 = smul.addr %s249, 4
        %s251 = scalar_lea.vmem [#allocation5], %s250
        %p252 = pneg %p44
        %p253 = pneg %p41
        %p254 = pneg %p65
        %p255 = pneg %p62
        %p256 = pneg %p86
        %p257 = pneg %p83
        %p258 = pneg %p107
        %p259 = pneg %p104
        %p260 = pneg %p128
        %p261 = pneg %p125
        %p262 = pneg %p154
        %p263 = pneg %p151
        %s264 = sand.u32 %s141, 1
        %s265 = scalar_lea.sflag [#allocation7], %s264
        %s266 = sand.u32 %s141, 1
        %s267 = smul.addr %s266, 8
        %s268 = scalar_lea.vmem [#allocation11], %s267
        %v270 = vld [vmem:[%s234] sm:$0xf]
        %v271 = vld [vmem:[#allocation8] sm:$0xf]
        %v272 = vld [vmem:[#allocation8 + $0x4] sm:$0xf]
        %v273 = vld [vmem:[#allocation8 + $0x8] sm:$0xf]
        %v274 = vld [vmem:[#allocation8 + $0xc] sm:$0xf]
        %v275 = vld [vmem:[%s2] sm:$0x1]
        %v277 = vlaneseq
        %v278 = vshrl.u32 %v277, 7
        %v279 = vsub.s32 0, %v278
        %v280 = vrot.slane %v275, %v279
        %v286 = vunpack.c.l.b16 %v271
        %v287 = vunpack.c.l.b16 %v272
        %v288 = vunpack.c.l.b16 %v273
        %v289 = vunpack.c.l.b16 %v274
        %v290 = vpack.c.b16 %v287, %v286
        %v291 = vpack.c.b16 %v289, %v288
        %vm294 = vcmask 261120
        %v296 = vsel %vm294, %v270, 0
        %298 = vmatprep.subr.bf16.mxu0 0
        %299 = vmatpush1.bf16.msra.mxu0 %v290
        %300 = vmatprep.subr.bf16.mxu0 0
        %301 = vmatpush1.bf16.msra.mxu0 %v291
        %302 = vmatprep.subr.bf16.mxu0 0
        %303 = vmatpush1.bf16.msra.mxu0 0
        %304 = vmatprep.subr.bf16.mxu0 0
        %305 = vmatpush1.bf16.msra.mxu0 0
        %306 = vmatprep.subr.bf16.mxu0 0
        %307 = vmatpush1.bf16.msra.mxu0 0
        %308 = vmatprep.subr.bf16.mxu0 0
        %309 = vmatpush1.bf16.msra.mxu0 0
        %310 = vmatprep.subr.bf16.mxu0 0
        %311 = vmatpush1.bf16.msra.mxu0 0
        %312 = vmatprep.subr.bf16.mxu0 0
        %313 = vmatpush1.bf16.msra.mxu0 0
        %314 = vmatprep.subr.bf16.mxu0 0
        %315 = vmatpush1.bf16.msra.mxu0 0
        %316 = vmatprep.subr.bf16.mxu0 0
        %317 = vmatpush1.bf16.msra.mxu0 0
        %318 = vmatprep.subr.bf16.mxu0 0
        %319 = vmatpush1.bf16.msra.mxu0 0
        %320 = vmatprep.subr.bf16.mxu0 0
        %321 = vmatpush1.bf16.msra.mxu0 0
        %322 = vmatprep.subr.bf16.mxu0 0
        %323 = vmatpush1.bf16.msra.mxu0 0
        %324 = vmatprep.subr.bf16.mxu0 0
        %325 = vmatpush1.bf16.msra.mxu0 0
        %326 = vmatprep.subr.bf16.mxu0 0
        %327 = vmatpush1.bf16.msra.mxu0 0
        %328 = vmatprep.subr.bf16.mxu0 0
        %329 = vmatpush1.bf16.msra.mxu0 0
        %330 = vmatprep.mubr.bf16.mxu0 0
        %331 = vmatmul.mubr.bf16.gmra.mrb[0].mxu0 %v296
        %v332 = vpop.f32.mrb[0].mxu0
        %v333 = vadd.f32 %v280, %v332
        %v334 = vpop.f32.mrb[0].mxu0
        %v335 = vpop.f32.mrb[0].mxu0
        %v336 = vpop.f32.mrb[0].mxu0
        %337 = vdwg.mxu0
        %v338 = vpack.c.bf16 %v333, %v333
        %vm339 = vcmask 60416
        %340 = vst.msk [vmem:[#allocation2] sm:$0xf] %vm339, %v338
        %v342 = vunpack.c.l.b16 %v338
        %v343 = vpack.c.b16 %v342, %v342
        %344 = vrot.lane.b32.xlu0 %v343, 120
        %v345 = vpop.permute.xlu0 %344
        %s347 = scalar_lea.vmem [#allocation2], 4
        %348 = vst.msk [vmem:[%s347] sm:$0xf] %vm339, %v345
        %349 = vrot.lane.b32.xlu0 %v343, 112
        %v350 = vpop.permute.xlu0 %349
        %s352 = scalar_lea.vmem [#allocation2], 8
        %353 = vst.msk [vmem:[%s352] sm:$0xf] %vm339, %v350
        %354 = vrot.lane.b32.xlu0 %v343, 104
        %v355 = vpop.permute.xlu0 %354
        %s357 = scalar_lea.vmem [#allocation2], 12
        %358 = vst.msk [vmem:[%s357] sm:$0xf] %vm339, %v355
        %359 = vrot.lane.b32.xlu0 %v343, 96
        %v360 = vpop.permute.xlu0 %359
        %s362 = scalar_lea.vmem [#allocation2], 16
        %363 = vst.msk [vmem:[%s362] sm:$0xf] %vm339, %v360
        %364 = vrot.lane.b32.xlu0 %v343, 88
        %v365 = vpop.permute.xlu0 %364
        %s367 = scalar_lea.vmem [#allocation2], 20
        %368 = vst.msk [vmem:[%s367] sm:$0xf] %vm339, %v365
        %369 = vrot.lane.b32.xlu0 %v343, 80
        %v370 = vpop.permute.xlu0 %369
        %s372 = scalar_lea.vmem [#allocation2], 24
        %373 = vst.msk [vmem:[%s372] sm:$0xf] %vm339, %v370
        %374 = vrot.lane.b32.xlu0 %v343, 72
        %v375 = vpop.permute.xlu0 %374
        %s377 = scalar_lea.vmem [#allocation2], 28
        %378 = vst.msk [vmem:[%s377] sm:$0xf] %vm339, %v375
        %379 = vrot.lane.b32.xlu0 %v343, 64
        %v380 = vpop.permute.xlu0 %379
        %s382 = scalar_lea.vmem [#allocation2], 32
        %383 = vst.msk [vmem:[%s382] sm:$0xf] %vm339, %v380
        %384 = vrot.lane.b32.xlu0 %v343, 56
        %v385 = vpop.permute.xlu0 %384
        %s387 = scalar_lea.vmem [#allocation2], 36
        %388 = vst.msk [vmem:[%s387] sm:$0xf] %vm339, %v385
        %389 = vrot.lane.b32.xlu0 %v343, 48
        %v390 = vpop.permute.xlu0 %389
        %s392 = scalar_lea.vmem [#allocation2], 40
        %393 = vst.msk [vmem:[%s392] sm:$0xf] %vm339, %v390
        %394 = vrot.lane.b32.xlu0 %v343, 40
        %v395 = vpop.permute.xlu0 %394
        %s397 = scalar_lea.vmem [#allocation2], 44
        %398 = vst.msk [vmem:[%s397] sm:$0xf] %vm339, %v395
        %v399 = vlaneseq
        %v400 = vshrl.u32 %v399, 7
        %v401 = vlaneseq
        %v402 = vand.u32 %v401, 127
        %vm403 = vcmp.lt.s32.totalorder %v402, %v400
        %v404 = vsel %vm403, -1e+30, 0.0
        loop: start=0, step=1, limit=4
        $region53: #{tpu_custom_call.1} parent=39 // loop_pre_header
          _
        $region54: #{tpu_custom_call.1} parent=39 // loop_header
          %s406 = sphi 0, %s410
          %p407 = scmp.ge.s32.totalorder %s406, 4
        $region55: #{tpu_custom_call.1} parent=39 // loop_header_branch
          %409 = sbr.rel (%p407) target = $region59
        $region56: #{tpu_custom_call.1} parent=39 // loop_body
          %s411 = smul.addr %s406, 4
          %s412 = scalar_lea.vmem [#allocation2], %s411
          %v413 = vld [vmem:[%s412] sm:$0xf]
          %s414 = sadd.s32 %s406, 4
          %s415 = smul.addr %s414, 4
          %s416 = scalar_lea.vmem [#allocation2], %s415
          %v417 = vld [vmem:[%s416] sm:$0xf]
          %s418 = sadd.s32 %s406, 8
          %s419 = smul.addr %s418, 4
          %s420 = scalar_lea.vmem [#allocation2], %s419
          %v421 = vld [vmem:[%s420] sm:$0xf]
          %vm422 = vcmask 64512
          %v424 = vsel %vm422, %v413, 0
          %v427 = vsel %vm422, %v417, 0
          %429 = vmatprep.subr.bf16.mxu0 0
          %430 = vmatpush1.bf16.xpose.msra.mxu0 %v427
          %431 = vmatprep.subr.bf16.mxu0 0
          %432 = vmatpush1.bf16.xpose.msra.mxu0 0
          %433 = vmatprep.subr.bf16.mxu0 0
          %434 = vmatpush1.bf16.xpose.msra.mxu0 0
          %435 = vmatprep.subr.bf16.mxu0 0
          %436 = vmatpush1.bf16.xpose.msra.mxu0 0
          %437 = vmatprep.subr.bf16.mxu0 0
          %438 = vmatpush1.bf16.xpose.msra.mxu0 0
          %439 = vmatprep.subr.bf16.mxu0 0
          %440 = vmatpush1.bf16.xpose.msra.mxu0 0
          %441 = vmatprep.subr.bf16.mxu0 0
          %442 = vmatpush1.bf16.xpose.msra.mxu0 0
          %443 = vmatprep.subr.bf16.mxu0 0
          %444 = vmatpush1.bf16.xpose.msra.mxu0 0
          %445 = vmatprep.subr.bf16.mxu0 0
          %446 = vmatpush1.bf16.xpose.msra.mxu0 0
          %447 = vmatprep.subr.bf16.mxu0 0
          %448 = vmatpush1.bf16.xpose.msra.mxu0 0
          %449 = vmatprep.subr.bf16.mxu0 0
          %450 = vmatpush1.bf16.xpose.msra.mxu0 0
          %451 = vmatprep.subr.bf16.mxu0 0
          %452 = vmatpush1.bf16.xpose.msra.mxu0 0
          %453 = vmatprep.subr.bf16.mxu0 0
          %454 = vmatpush1.bf16.xpose.msra.mxu0 0
          %455 = vmatprep.subr.bf16.mxu0 0
          %456 = vmatpush1.bf16.xpose.msra.mxu0 0
          %457 = vmatprep.subr.bf16.mxu0 0
          %458 = vmatpush1.bf16.xpose.msra.mxu0 0
          %459 = vmatprep.subr.bf16.mxu0 0
          %460 = vmatpush1.bf16.xpose.msra.mxu0 0
          %461 = vmatprep.mubr.bf16.mxu0 0
          %462 = vmatmul.mubr.bf16.gmra.mrb[0].mxu0 %v424
          %v463 = vpop.f32.mrb[0].mxu0
          %v464 = vadd.f32 %v404, %v463
          %v465 = vpop.f32.mrb[0].mxu0
          %v466 = vpop.f32.mrb[0].mxu0
          %v467 = vpop.f32.mrb[0].mxu0
          %468 = vdwg.mxu0
          %v469 = vsel %vm422, %v464, -inf
          %470 = vmax.xlane.f32.xlu0 %v469
          %v471 = vpop.xlane.xlu0 %470
          %v472 = vsub.f32 %v464, %v471
          %v473 = vmul.f32 %v472, 1.442695
          %v474 = vpow.pop %v473
          %v475 = vsel %vm422, %v474, 0.0
          %476 = vadd.xlane.f32.xlu0 %v475
          %v477 = vpop.xlane.xlu0 %476
          %v478 = vpack.c.bf16 %v474, %v474
          %v480 = vsel %vm422, %v478, 0
          %vm482 = vcmask 1043456
          %v484 = vsel %vm482, %v421, 0
          %486 = vmatprep.subr.bf16.mxu0 0
          %487 = vmatpush1.bf16.msra.mxu0 %v484
          %488 = vmatprep.subr.bf16.mxu0 0
          %489 = vmatpush1.bf16.msra.mxu0 0
          %490 = vmatprep.subr.bf16.mxu0 0
          %491 = vmatpush1.bf16.msra.mxu0 0
          %492 = vmatprep.subr.bf16.mxu0 0
          %493 = vmatpush1.bf16.msra.mxu0 0
          %494 = vmatprep.subr.bf16.mxu0 0
          %495 = vmatpush1.bf16.msra.mxu0 0
          %496 = vmatprep.subr.bf16.mxu0 0
          %497 = vmatpush1.bf16.msra.mxu0 0
          %498 = vmatprep.subr.bf16.mxu0 0
          %499 = vmatpush1.bf16.msra.mxu0 0
          %500 = vmatprep.subr.bf16.mxu0 0
          %501 = vmatpush1.bf16.msra.mxu0 0
          %502 = vmatprep.subr.bf16.mxu0 0
          %503 = vmatpush1.bf16.msra.mxu0 0
          %504 = vmatprep.subr.bf16.mxu0 0
          %505 = vmatpush1.bf16.msra.mxu0 0
          %506 = vmatprep.subr.bf16.mxu0 0
          %507 = vmatpush1.bf16.msra.mxu0 0
          %508 = vmatprep.subr.bf16.mxu0 0
          %509 = vmatpush1.bf16.msra.mxu0 0
          %510 = vmatprep.subr.bf16.mxu0 0
          %511 = vmatpush1.bf16.msra.mxu0 0
          %512 = vmatprep.subr.bf16.mxu0 0
          %513 = vmatpush1.bf16.msra.mxu0 0
          %514 = vmatprep.subr.bf16.mxu0 0
          %515 = vmatpush1.bf16.msra.mxu0 0
          %516 = vmatprep.subr.bf16.mxu0 0
          %517 = vmatpush1.bf16.msra.mxu0 0
          %518 = vmatprep.mubr.bf16.mxu0 0
          %519 = vmatmul.mubr.bf16.gmra.mrb[0].mxu0 %v480
          %v520 = vpop.f32.mrb[0].mxu0
          %v521 = vadd.f32 0.0, %v520
          %v522 = vpop.f32.mrb[0].mxu0
          %v523 = vpop.f32.mrb[0].mxu0
          %v524 = vpop.f32.mrb[0].mxu0
          %525 = vdwg.mxu0
          %v526 = vrcp.pop %v477
          %v527 = vmul.f32 %v521, %v526
          %v528 = vpack.c.bf16 %v527, %v527
          %s529 = smul.addr %s406, 4
          %s530 = scalar_lea.vmem [#allocation3], %s529
          %531 = vst.msk [vmem:[%s530] sm:$0xf] %vm339, %v528
        $region57: #{tpu_custom_call.1} parent=39 // loop_footer
          %s410 = sadd.s32 1, %s406
        $region58: #{tpu_custom_call.1} parent=39 // loop_footer_branch
          %405 = sbr.rel target = $region54
        $region59: #{tpu_custom_call.1} parent=39 // loop_exit
          _
        %v532 = vld [vmem:[#allocation3] sm:$0xf]
        %533 = vst.msk [vmem:[#allocation4] sm:$0xf] %vm339, %v532
        %s534 = scalar_lea.vmem [#allocation3], 4
        %v535 = vld [vmem:[%s534] sm:$0xf]
        %537 = vrot.lane.b32.xlu0 %v535, 8
        %v538 = vpop.permute.xlu0 %537
        %vm540 = vcmask 126016
        %541 = vst.msk [vmem:[#allocation4] sm:$0xf] %vm540, %v538
        %s542 = scalar_lea.vmem [#allocation3], 8
        %v543 = vld [vmem:[%s542] sm:$0xf]
        %545 = vrot.lane.b32.xlu0 %v543, 16
        %v546 = vpop.permute.xlu0 %545
        %vm548 = vcmask 191616
        %549 = vst.msk [vmem:[#allocation4] sm:$0xf] %vm548, %v546
        %s550 = scalar_lea.vmem [#allocation3], 12
        %v551 = vld [vmem:[%s550] sm:$0xf]
        %553 = vrot.lane.b32.xlu0 %v551, 24
        %v554 = vpop.permute.xlu0 %553
        %vm556 = vcmask 257216
        %557 = vst.msk [vmem:[#allocation4] sm:$0xf] %vm556, %v554
        %v558 = vld [vmem:[#allocation4] sm:$0xf]
        %v559 = vld [vmem:[#allocation10] sm:$0xf]
        %v560 = vld [vmem:[#allocation10 + $0x4] sm:$0xf]
        %v561 = vld [vmem:[#allocation10 + $0x8] sm:$0xf]
        %v562 = vld [vmem:[#allocation10 + $0xc] sm:$0xf]
        %v563 = vld [vmem:[%s4] sm:$0x1]
        %v565 = vlaneseq
        %v566 = vshrl.u32 %v565, 7
        %v567 = vsub.s32 0, %v566
        %v568 = vrot.slane %v563, %v567
        %v574 = vunpack.c.l.b16 %v559
        %v575 = vunpack.c.l.b16 %v560
        %v576 = vunpack.c.l.b16 %v561
        %v577 = vunpack.c.l.b16 %v562
        %v578 = vpack.c.b16 %v575, %v574
        %v579 = vpack.c.b16 %v577, %v576
        %v583 = vsel %vm294, %v558, 0
        %585 = vmatprep.subr.bf16.mxu0 0
        %586 = vmatpush1.bf16.msra.mxu0 %v578
        %587 = vmatprep.subr.bf16.mxu0 0
        %588 = vmatpush1.bf16.msra.mxu0 %v579
        %589 = vmatprep.subr.bf16.mxu0 0
        %590 = vmatpush1.bf16.msra.mxu0 0
        %591 = vmatprep.subr.bf16.mxu0 0
        %592 = vmatpush1.bf16.msra.mxu0 0
        %593 = vmatprep.subr.bf16.mxu0 0
        %594 = vmatpush1.bf16.msra.mxu0 0
        %595 = vmatprep.subr.bf16.mxu0 0
        %596 = vmatpush1.bf16.msra.mxu0 0
        %597 = vmatprep.subr.bf16.mxu0 0
        %598 = vmatpush1.bf16.msra.mxu0 0
        %599 = vmatprep.subr.bf16.mxu0 0
        %600 = vmatpush1.bf16.msra.mxu0 0
        %601 = vmatprep.subr.bf16.mxu0 0
        %602 = vmatpush1.bf16.msra.mxu0 0
        %603 = vmatprep.subr.bf16.mxu0 0
        %604 = vmatpush1.bf16.msra.mxu0 0
        %605 = vmatprep.subr.bf16.mxu0 0
        %606 = vmatpush1.bf16.msra.mxu0 0
        %607 = vmatprep.subr.bf16.mxu0 0
        %608 = vmatpush1.bf16.msra.mxu0 0
        %609 = vmatprep.subr.bf16.mxu0 0
        %610 = vmatpush1.bf16.msra.mxu0 0
        %611 = vmatprep.subr.bf16.mxu0 0
        %612 = vmatpush1.bf16.msra.mxu0 0
        %613 = vmatprep.subr.bf16.mxu0 0
        %614 = vmatpush1.bf16.msra.mxu0 0
        %615 = vmatprep.subr.bf16.mxu0 0
        %616 = vmatpush1.bf16.msra.mxu0 0
        %617 = vmatprep.mubr.bf16.mxu0 0
        %618 = vmatmul.mubr.bf16.gmra.mrb[0].mxu0 %v583
        %v619 = vpop.f32.mrb[0].mxu0
        %v620 = vadd.f32 %v568, %v619
        %v621 = vpop.f32.mrb[0].mxu0
        %v622 = vpop.f32.mrb[0].mxu0
        %v623 = vpop.f32.mrb[0].mxu0
        %624 = vdwg.mxu0
        %625 = vst.msk [vmem:[%s268] sm:$0xff] %vm294, %v620
        %s626 = sand.u32 %s141, 1
        %s627 = scalar_lea.sflag [#allocation7], %s626
        %s628 = sand.u32 %s141, 1
        %s629 = smul.addr %s628, 8
        %s630 = scalar_lea.vmem [#allocation11], %s629
        // Predicated region
        $region60: #{tpu_custom_call.1} parent=39 // pred_check
          %p631 = pneg %p151
        $region61: #{tpu_custom_call.1} parent=39 // pred_check_branch
          %633 = sbr.rel (%p631) target = $region63
        $region62: #{tpu_custom_call.1} parent=39 // pred_region
          %s635 = ssub.s32 128, 128
          %636 = vsyncadd %s627, %s635
          %s637 = smul.addr %s23, 128
          %s638 = scalar_lea.hbm %s5, %s637
          %s640 = sshll.u32 %s630, 4
          %s641 = int_to_ptr.vmem [resolvable:$true] %s640
          %643 = dma.vmem_to_hbm [thread:$0]  %s641, 128, %s638, %s627
        $region63: #{tpu_custom_call.1} parent=39 // pred_fallthru
          _
      $region40: #{tpu_custom_call.1} parent=5 // pred_fallthru
        _
      %p644 = scmp.le.s32.totalorder 2, %s18
      // Predicated region
      $region64: #{tpu_custom_call.1} parent=5 // pred_check
        %p645 = pneg %p644
      $region65: #{tpu_custom_call.1} parent=5 // pred_check_branch
        %647 = sbr.rel (%p645) target = $region67
      $region66: #{tpu_custom_call.1} parent=5 // pred_region
        %s648 = ssub.s32 %s18, 2
        // Predicated region
        $region68: #{tpu_custom_call.1} parent=66 // pred_check
          %p649 = pneg %p157
        $region69: #{tpu_custom_call.1} parent=66 // pred_check_branch
          %651 = sbr.rel (%p649) target = $region71
        $region70: #{tpu_custom_call.1} parent=66 // pred_region
          %s652 = sand.u32 %s142, 1
          %s653 = scalar_lea.sflag [#allocation7], %s652
          %s654 = sand.u32 %s142, 1
          %s655 = smul.addr %s654, 8
          %s656 = scalar_lea.vmem [#allocation11], %s655
          %657 = dma.done %s653, 128
        $region71: #{tpu_custom_call.1} parent=66 // pred_fallthru
          _
      $region67: #{tpu_custom_call.1} parent=5 // pred_fallthru
        _
    $region6: #{tpu_custom_call.1} parent=1 // loop_footer
      %s22 = sadd.s32 1, %s18
    $region7: #{tpu_custom_call.1} parent=1 // loop_footer_branch
      %17 = sbr.rel target = $region3
    $region8: #{tpu_custom_call.1} parent=1 // loop_exit
      _
    %658 = vsyncpa [#allocation6], 1
    %s659 = scalar_lea.sflag [#allocation6], 1
    %660 = vsyncpa %s659, 1
    %661 = vsyncpa [#allocation9], 1
    %662 = vsyncpa [#allocation7], 1
    %s663 = scalar_lea.sflag [#allocation7], 1
    %664 = vsyncpa %s663, 1

</llo_original>
